<compile_context>
chip_gen: v7x
topology: tpu7x:2x2x1
jax: 0.10.0
libtpu: 0.0.40
codegen_flags: <defaults>
</compile_context>

<pallas_src>
import functools

import jax
import jax.numpy as jnp
from jax.experimental import pallas as pl
from jax.experimental.pallas import tpu as pltpu


def _autoencoder_kernel(
    x_ref,
    w1_ref, b1_ref, w2_ref, b2_ref, w3_ref, b3_ref,   # encoder
    w4_ref, b4_ref, w5_ref, b5_ref, w6_ref, b6_ref,   # decoder
    enc_ref, dec_ref,
    *, act_dtype,
):
    # Biases were pre-cast to act_dtype in the wrapper; hoist loads once
    # (JAX does not CSE broadcast_in_dim).
    b1 = b1_ref[...]
    b2 = b2_ref[...]
    b3 = b3_ref[...]
    b4 = b4_ref[...]
    b5 = b5_ref[...]
    b6 = b6_ref[...]

    def dense(h, w_ref, b):
        # Weights are already in the matmul dtype (pre-cast once in the
        # wrapper); only the activation may need a cast at the dot boundary.
        # MXU accumulates internally in f32; result dtype follows act_dtype.
        return (
            jnp.dot(
                h.astype(w_ref.dtype),
                w_ref[...],
                preferred_element_type=act_dtype,
            )
            + b
        )

    x = x_ref[...]

    # ---- encoder: Linear -> Tanh -> Linear -> Tanh -> Linear ----
    h = jnp.tanh(dense(x, w1_ref, b1))
    h = jnp.tanh(dense(h, w2_ref, b2))
    enc = dense(h, w3_ref, b3)
    enc_ref[...] = enc.astype(enc_ref.dtype)

    # ---- decoder: Linear -> Tanh -> Linear -> Tanh -> Linear ----
    h = jnp.tanh(dense(enc, w4_ref, b4))
    h = jnp.tanh(dense(h, w5_ref, b5))
    dec_ref[...] = dense(h, w6_ref, b6).astype(dec_ref.dtype)


def _round_up(x, m):
    return ((x + m - 1) // m) * m


def autoencoder_forward(
    x,
    params,
    *,
    tile_b=8192,                     # large tiles amortize per-step overhead
    use_bf16_matmul=True,            # bf16 MXU operands, f32 accumulation
    bf16_elementwise=False,          # bf16 bias-add/tanh (v6e/v7x only)
    out_dtype=jnp.float32,           # bf16 halves enc/dec HBM writes if OK
    vmem_budget_bytes=24 * 1024 * 1024,  # conservative across v5e/v6e/v7x
    pinned_single_buffer=False,      # pl.Buffered(1) on pinned weights
):
    """Fused AutoEncoder forward. params = [w1,b1,...,w6,b6], W:[in,out], b:[1,out]."""
    B, ndim = x.shape
    hid1 = params[0].shape[1]
    hid2 = params[2].shape[1]
    outdim = params[4].shape[1]

    mm_dtype = jnp.bfloat16 if (use_bf16_matmul or bf16_elementwise) else jnp.float32
    act_dtype = jnp.bfloat16 if bf16_elementwise else jnp.float32

    # Pre-cast weights/biases ONCE in the wrapper (removes per-grid-step casts
    # inside the kernel and halves pinned-weight VMEM / DMA when bf16).
    ws = [params[2 * i].astype(mm_dtype) for i in range(6)]
    bs = [params[2 * i + 1].astype(act_dtype) for i in range(6)]
    flat_params = []
    for w, b in zip(ws, bs):
        flat_params += [w, b]

    # ---- batch tile selection ----
    b8 = _round_up(B, 8)
    tb = min(tile_b, b8)

    # v7x megacore: make sure there are >=2 grid steps to shard across the
    # 2 TensorCores whenever the batch allows it (no-op on v5e/v6e's 1 TC).
    if b8 >= 16 and pl.cdiv(b8, tb) < 2:
        tb = _round_up(b8 // 2, 8)

    # VMEM cap: double-buffered x/enc/dec rows + live intermediates per row.
    out_isz = jnp.dtype(out_dtype).itemsize
    act_isz = jnp.dtype(act_dtype).itemsize
    per_row = (
        2 * ndim * x.dtype.itemsize
        + 2 * (outdim + ndim) * out_isz
        + (2 * hid1 + 2 * hid2 + outdim + ndim) * act_isz
    )
    tb_cap = max(8, (vmem_budget_bytes // per_row) // 8 * 8)
    tb = max(8, min(tb, tb_cap))

    b_padded = _round_up(B, tb)
    if b_padded != B:
        x = jnp.pad(x, ((0, b_padded - B), (0, 0)))

    grid = (pl.cdiv(b_padded, tb),)

    def row_spec(n):
        return pl.BlockSpec((tb, n), lambda i: (i, 0))

    def pinned_spec(arr):
        # Full-array block with a constant index_map -> stays resident in
        # VMEM across all grid steps.
        idx = lambda i: (0, 0)
        if pinned_single_buffer:
            try:
                # Constants don't need double-buffering; reclaims VMEM when
                # hid1/hid2 get large (matters most on v7x's 64 MiB VMEM).
                return pl.BlockSpec(arr.shape, idx, pipeline_mode=pl.Buffered(1))
            except Exception:
                pass
        return pl.BlockSpec(arr.shape, idx)

    in_specs = [row_spec(ndim)] + [pinned_spec(p) for p in flat_params]
    out_specs = (row_spec(outdim), row_spec(ndim))

    # Scoped-VMEM limit sized to the actual footprint (keeps v7x happy while
    # still allowing big tiles on v5e/v6e).
    weight_bytes = int(sum(int(p.size) * p.dtype.itemsize for p in flat_params))
    vmem_limit = int(min(48 * 1024 * 1024,
                         max(16 * 1024 * 1024, 2 * tb * per_row + 4 * weight_bytes)))

    # Advisory cost hint for XLA's scheduler around this small kernel.
    layer_dims = [
        (ndim, hid1), (hid1, hid2), (hid2, outdim),
        (outdim, hid2), (hid2, hid1), (hid1, ndim),
    ]
    flops = int(2 * b_padded * sum(fi * fo for fi, fo in layer_dims))
    transcendentals = int(b_padded * 2 * (hid1 + hid2))
    bytes_accessed = int(
        b_padded * ndim * x.dtype.itemsize
        + b_padded * (outdim + ndim) * out_isz
        + weight_bytes
    )
    cost = pl.CostEstimate(
        flops=flops, transcendentals=transcendentals, bytes_accessed=bytes_accessed
    )

    kernel = functools.partial(_autoencoder_kernel, act_dtype=act_dtype)

    enc, dec = pl.pallas_call(
        kernel,
        grid=grid,
        out_shape=(
            jax.ShapeDtypeStruct((b_padded, outdim), out_dtype),
            jax.ShapeDtypeStruct((b_padded, ndim), out_dtype),
        ),
        in_specs=in_specs,
        out_specs=out_specs,
        compiler_params=pltpu.CompilerParams(
            dimension_semantics=("parallel",),      # megacore split on v7x
            vmem_limit_bytes=vmem_limit,
        ),
        cost_estimate=cost,
    )(x, *flat_params)

    if b_padded != B:
        enc = enc[:B]
        dec = dec[:B]
    return enc, dec


def init_params(key, ndim, outdim, hid1, hid2):
    """Deterministic init mimicking PyTorch nn.Linear default (uniform +-1/sqrt(fan_in))."""
    layer_dims = [
        (ndim, hid1), (hid1, hid2), (hid2, outdim),   # encoder
        (outdim, hid2), (hid2, hid1), (hid1, ndim),   # decoder
    ]
    params = []
    for (fan_in, fan_out) in layer_dims:
        key, kw, kb = jax.random.split(key, 3)
        bound = 1.0 / jnp.sqrt(float(fan_in))
        w = jax.random.uniform(kw, (fan_in, fan_out), jnp.float32, -bound, bound)
        b = jax.random.uniform(kb, (1, fan_out), jnp.float32, -bound, bound)
        params += [w, b]
    return params


def reference_forward(x, params):
    w1, b1, w2, b2, w3, b3, w4, b4, w5, b5, w6, b6 = params
    h = jnp.tanh(x @ w1 + b1)
    h = jnp.tanh(h @ w2 + b2)
    enc = h @ w3 + b3
    h = jnp.tanh(enc @ w4 + b4)
    h = jnp.tanh(h @ w5 + b5)
    dec = h @ w6 + b6
    return enc, dec


if __name__ == "__main__":
    ndim, outdim, hid1, hid2 = 32, 16, 64, 32
    B = 100  # not a multiple of 8/tile -> exercises padding + 2-step grid

    key = jax.random.PRNGKey(0)
    key, kx = jax.random.split(key)
    x = jax.random.normal(kx, (B, ndim), jnp.float32)
    params = init_params(key, ndim, outdim, hid1, hid2)

    enc_ref, dec_ref = reference_forward(x, params)

    # 1) Exact f32 path (tight tolerance).
    enc32, dec32 = autoencoder_forward(
        x, params, use_bf16_matmul=False, bf16_elementwise=False)
    jax.block_until_ready((enc32, dec32))
    assert enc32.shape == (B, outdim) and dec32.shape == (B, ndim)
    assert jnp.allclose(enc32, enc_ref, atol=1e-5, rtol=1e-5)
    assert jnp.allclose(dec32, dec_ref, atol=1e-5, rtol=1e-5)

    # 2) bf16 MXU operands, f32 elementwise (v5e-safe fast path).
    encb, decb = autoencoder_forward(
        x, params, use_bf16_matmul=True, bf16_elementwise=False)
    jax.block_until_ready((encb, decb))
    assert encb.shape == (B, outdim) and decb.shape == (B, ndim)
    assert jnp.allclose(encb, enc_ref, atol=5e-2, rtol=5e-2)
    assert jnp.allclose(decb, dec_ref, atol=5e-2, rtol=5e-2)

    # 3) bf16 activations end-to-end (v6e/v7x fast path), f32 outputs.
    ence, dece = autoencoder_forward(
        x, params, use_bf16_matmul=True, bf16_elementwise=True)
    jax.block_until_ready((ence, dece))
    assert ence.shape == (B, outdim) and dece.shape == (B, ndim)
    assert jnp.allclose(ence, enc_ref, atol=1e-1, rtol=1e-1)
    assert jnp.allclose(dece, dec_ref, atol=1e-1, rtol=1e-1)

    print("KERNEL_OK")
</pallas_src>

<mosaic_0001>
module attributes {stable_mosaic.version = 11 : i64} {
  func.func @_autoencoder_kernel(%arg0: i32, %arg1: memref<56x32xf32, #tpu.memory_space<vmem>>, %arg2: memref<32x64xf32, #tpu.memory_space<vmem>>, %arg3: memref<1x64xf32, #tpu.memory_space<vmem>>, %arg4: memref<64x32xf32, #tpu.memory_space<vmem>>, %arg5: memref<1x32xf32, #tpu.memory_space<vmem>>, %arg6: memref<32x16xf32, #tpu.memory_space<vmem>>, %arg7: memref<1x16xf32, #tpu.memory_space<vmem>>, %arg8: memref<16x32xf32, #tpu.memory_space<vmem>>, %arg9: memref<1x32xf32, #tpu.memory_space<vmem>>, %arg10: memref<32x64xf32, #tpu.memory_space<vmem>>, %arg11: memref<1x64xf32, #tpu.memory_space<vmem>>, %arg12: memref<64x32xf32, #tpu.memory_space<vmem>>, %arg13: memref<1x32xf32, #tpu.memory_space<vmem>>, %arg14: memref<56x16xf32, #tpu.memory_space<vmem>>, %arg15: memref<56x32xf32, #tpu.memory_space<vmem>>) attributes {dimension_semantics = [#tpu.dimension_semantics<parallel>], iteration_bounds = array<i64: 2>, scalar_prefetch = 0 : i64, scratch_operands = 0 : i64, tpu.core_type = #tpu.core_type<tc>, window_params = [{transform_indices = @transform_0, window_bounds = array<i64: 56, 32>}, {pipeline_mode = #tpu.pipeline_mode<synchronous>, transform_indices = @transform_1, window_bounds = array<i64: 32, 64>}, {pipeline_mode = #tpu.pipeline_mode<synchronous>, transform_indices = @transform_2, window_bounds = array<i64: 1, 64>}, {pipeline_mode = #tpu.pipeline_mode<synchronous>, transform_indices = @transform_3, window_bounds = array<i64: 64, 32>}, {pipeline_mode = #tpu.pipeline_mode<synchronous>, transform_indices = @transform_4, window_bounds = array<i64: 1, 32>}, {pipeline_mode = #tpu.pipeline_mode<synchronous>, transform_indices = @transform_5, window_bounds = array<i64: 32, 16>}, {pipeline_mode = #tpu.pipeline_mode<synchronous>, transform_indices = @transform_6, window_bounds = array<i64: 1, 16>}, {pipeline_mode = #tpu.pipeline_mode<synchronous>, transform_indices = @transform_7, window_bounds = array<i64: 16, 32>}, {pipeline_mode = #tpu.pipeline_mode<synchronous>, transform_indices = @transform_8, window_bounds = array<i64: 1, 32>}, {pipeline_mode = #tpu.pipeline_mode<synchronous>, transform_indices = @transform_9, window_bounds = array<i64: 32, 64>}, {pipeline_mode = #tpu.pipeline_mode<synchronous>, transform_indices = @transform_10, window_bounds = array<i64: 1, 64>}, {pipeline_mode = #tpu.pipeline_mode<synchronous>, transform_indices = @transform_11, window_bounds = array<i64: 64, 32>}, {pipeline_mode = #tpu.pipeline_mode<synchronous>, transform_indices = @transform_12, window_bounds = array<i64: 1, 32>}, {transform_indices = @transform_13, window_bounds = array<i64: 56, 16>}, {transform_indices = @transform_14, window_bounds = array<i64: 56, 32>}]} {
    %c0 = arith.constant 0 : index
    %c0_0 = arith.constant 0 : index
    %0 = vector.load %arg3[%c0, %c0_0] : memref<1x64xf32, #tpu.memory_space<vmem>>, vector<1x64xf32>
    %c0_1 = arith.constant 0 : index
    %c0_2 = arith.constant 0 : index
    %1 = vector.load %arg5[%c0_1, %c0_2] : memref<1x32xf32, #tpu.memory_space<vmem>>, vector<1x32xf32>
    %c0_3 = arith.constant 0 : index
    %c0_4 = arith.constant 0 : index
    %2 = vector.load %arg7[%c0_3, %c0_4] : memref<1x16xf32, #tpu.memory_space<vmem>>, vector<1x16xf32>
    %c0_5 = arith.constant 0 : index
    %c0_6 = arith.constant 0 : index
    %3 = vector.load %arg9[%c0_5, %c0_6] : memref<1x32xf32, #tpu.memory_space<vmem>>, vector<1x32xf32>
    %c0_7 = arith.constant 0 : index
    %c0_8 = arith.constant 0 : index
    %4 = vector.load %arg11[%c0_7, %c0_8] : memref<1x64xf32, #tpu.memory_space<vmem>>, vector<1x64xf32>
    %c0_9 = arith.constant 0 : index
    %c0_10 = arith.constant 0 : index
    %5 = vector.load %arg13[%c0_9, %c0_10] : memref<1x32xf32, #tpu.memory_space<vmem>>, vector<1x32xf32>
    %c0_11 = arith.constant 0 : index
    %c0_12 = arith.constant 0 : index
    %6 = vector.load %arg1[%c0_11, %c0_12] : memref<56x32xf32, #tpu.memory_space<vmem>>, vector<56x32xf32>
    %c0_13 = arith.constant 0 : index
    %c0_14 = arith.constant 0 : index
    %7 = vector.load %arg2[%c0_13, %c0_14] : memref<32x64xf32, #tpu.memory_space<vmem>>, vector<32x64xf32>
    %cst = arith.constant dense<0.000000e+00> : vector<56x64xf32>
    %8 = tpu.matmul %6, %7, %cst {dimension_numbers = #tpu.dot_dimension_numbers<[1], [0], [0], [1], [0, 0, 1, 1], [], []>} : vector<56x32xf32>, vector<32x64xf32>, vector<56x64xf32> -> vector<56x64xf32>
    %9 = vector.broadcast %0 : vector<1x64xf32> to vector<56x64xf32>
    %10 = arith.addf %8, %9 : vector<56x64xf32>
    %11 = math.tanh %10 : vector<56x64xf32>
    %c0_15 = arith.constant 0 : index
    %c0_16 = arith.constant 0 : index
    %12 = vector.load %arg4[%c0_15, %c0_16] : memref<64x32xf32, #tpu.memory_space<vmem>>, vector<64x32xf32>
    %cst_17 = arith.constant dense<0.000000e+00> : vector<56x32xf32>
    %13 = tpu.matmul %11, %12, %cst_17 {dimension_numbers = #tpu.dot_dimension_numbers<[1], [0], [0], [1], [0, 0, 1, 1], [], []>} : vector<56x64xf32>, vector<64x32xf32>, vector<56x32xf32> -> vector<56x32xf32>
    %14 = vector.broadcast %1 : vector<1x32xf32> to vector<56x32xf32>
    %15 = arith.addf %13, %14 : vector<56x32xf32>
    %16 = math.tanh %15 : vector<56x32xf32>
    %c0_18 = arith.constant 0 : index
    %c0_19 = arith.constant 0 : index
    %17 = vector.load %arg6[%c0_18, %c0_19] : memref<32x16xf32, #tpu.memory_space<vmem>>, vector<32x16xf32>
    %cst_20 = arith.constant dense<0.000000e+00> : vector<56x16xf32>
    %18 = tpu.matmul %16, %17, %cst_20 {dimension_numbers = #tpu.dot_dimension_numbers<[1], [0], [0], [1], [0, 0, 1, 1], [], []>} : vector<56x32xf32>, vector<32x16xf32>, vector<56x16xf32> -> vector<56x16xf32>
    %19 = vector.broadcast %2 : vector<1x16xf32> to vector<56x16xf32>
    %20 = arith.addf %18, %19 : vector<56x16xf32>
    %c0_21 = arith.constant 0 : index
    %c0_22 = arith.constant 0 : index
    %21 = vector.load %arg14[%c0_21, %c0_22] : memref<56x16xf32, #tpu.memory_space<vmem>>, vector<56x16xf32>
    tpu.vector_store %arg14[%c0_21, %c0_22], %20 {strides = array<i32>} : memref<56x16xf32, #tpu.memory_space<vmem>>, vector<56x16xf32>,
    %c0_23 = arith.constant 0 : index
    %c0_24 = arith.constant 0 : index
    %22 = vector.load %arg8[%c0_23, %c0_24] : memref<16x32xf32, #tpu.memory_space<vmem>>, vector<16x32xf32>
    %cst_25 = arith.constant dense<0.000000e+00> : vector<56x32xf32>
    %23 = tpu.matmul %20, %22, %cst_25 {dimension_numbers = #tpu.dot_dimension_numbers<[1], [0], [0], [1], [0, 0, 1, 1], [], []>} : vector<56x16xf32>, vector<16x32xf32>, vector<56x32xf32> -> vector<56x32xf32>
    %24 = vector.broadcast %3 : vector<1x32xf32> to vector<56x32xf32>
    %25 = arith.addf %23, %24 : vector<56x32xf32>
    %26 = math.tanh %25 : vector<56x32xf32>
    %c0_26 = arith.constant 0 : index
    %c0_27 = arith.constant 0 : index
    %27 = vector.load %arg10[%c0_26, %c0_27] : memref<32x64xf32, #tpu.memory_space<vmem>>, vector<32x64xf32>
    %cst_28 = arith.constant dense<0.000000e+00> : vector<56x64xf32>
    %28 = tpu.matmul %26, %27, %cst_28 {dimension_numbers = #tpu.dot_dimension_numbers<[1], [0], [0], [1], [0, 0, 1, 1], [], []>} : vector<56x32xf32>, vector<32x64xf32>, vector<56x64xf32> -> vector<56x64xf32>
    %29 = vector.broadcast %4 : vector<1x64xf32> to vector<56x64xf32>
    %30 = arith.addf %28, %29 : vector<56x64xf32>
    %31 = math.tanh %30 : vector<56x64xf32>
    %c0_29 = arith.constant 0 : index
    %c0_30 = arith.constant 0 : index
    %32 = vector.load %arg12[%c0_29, %c0_30] : memref<64x32xf32, #tpu.memory_space<vmem>>, vector<64x32xf32>
    %cst_31 = arith.constant dense<0.000000e+00> : vector<56x32xf32>
    %33 = tpu.matmul %31, %32, %cst_31 {dimension_numbers = #tpu.dot_dimension_numbers<[1], [0], [0], [1], [0, 0, 1, 1], [], []>} : vector<56x64xf32>, vector<64x32xf32>, vector<56x32xf32> -> vector<56x32xf32>
    %34 = vector.broadcast %5 : vector<1x32xf32> to vector<56x32xf32>
    %35 = arith.addf %33, %34 : vector<56x32xf32>
    %c0_32 = arith.constant 0 : index
    %c0_33 = arith.constant 0 : index
    %36 = vector.load %arg15[%c0_32, %c0_33] : memref<56x32xf32, #tpu.memory_space<vmem>>, vector<56x32xf32>
    tpu.vector_store %arg15[%c0_32, %c0_33], %35 {strides = array<i32>} : memref<56x32xf32, #tpu.memory_space<vmem>>, vector<56x32xf32>,
    return
  }
  func.func @transform_0(%arg0: i32) -> (i32, i32) {
    %c0_i32 = arith.constant 0 : i32
    %c0_i32_0 = arith.constant 0 : i32
    return %arg0, %c0_i32 : i32, i32
  }
  func.func @transform_1(%arg0: i32) -> (i32, i32) {
    %c0_i32 = arith.constant 0 : i32
    %c0_i32_0 = arith.constant 0 : i32
    %c0_i32_1 = arith.constant 0 : i32
    return %c0_i32, %c0_i32_0 : i32, i32
  }
  func.func @transform_2(%arg0: i32) -> (i32, i32) {
    %c0_i32 = arith.constant 0 : i32
    %c0_i32_0 = arith.constant 0 : i32
    %c0_i32_1 = arith.constant 0 : i32
    return %c0_i32, %c0_i32_0 : i32, i32
  }
  func.func @transform_3(%arg0: i32) -> (i32, i32) {
    %c0_i32 = arith.constant 0 : i32
    %c0_i32_0 = arith.constant 0 : i32
    %c0_i32_1 = arith.constant 0 : i32
    return %c0_i32, %c0_i32_0 : i32, i32
  }
  func.func @transform_4(%arg0: i32) -> (i32, i32) {
    %c0_i32 = arith.constant 0 : i32
    %c0_i32_0 = arith.constant 0 : i32
    %c0_i32_1 = arith.constant 0 : i32
    return %c0_i32, %c0_i32_0 : i32, i32
  }
  func.func @transform_5(%arg0: i32) -> (i32, i32) {
    %c0_i32 = arith.constant 0 : i32
    %c0_i32_0 = arith.constant 0 : i32
    %c0_i32_1 = arith.constant 0 : i32
    return %c0_i32, %c0_i32_0 : i32, i32
  }
  func.func @transform_6(%arg0: i32) -> (i32, i32) {
    %c0_i32 = arith.constant 0 : i32
    %c0_i32_0 = arith.constant 0 : i32
    %c0_i32_1 = arith.constant 0 : i32
    return %c0_i32, %c0_i32_0 : i32, i32
  }
  func.func @transform_7(%arg0: i32) -> (i32, i32) {
    %c0_i32 = arith.constant 0 : i32
    %c0_i32_0 = arith.constant 0 : i32
    %c0_i32_1 = arith.constant 0 : i32
    return %c0_i32, %c0_i32_0 : i32, i32
  }
  func.func @transform_8(%arg0: i32) -> (i32, i32) {
    %c0_i32 = arith.constant 0 : i32
    %c0_i32_0 = arith.constant 0 : i32
    %c0_i32_1 = arith.constant 0 : i32
    return %c0_i32, %c0_i32_0 : i32, i32
  }
  func.func @transform_9(%arg0: i32) -> (i32, i32) {
    %c0_i32 = arith.constant 0 : i32
    %c0_i32_0 = arith.constant 0 : i32
    %c0_i32_1 = arith.constant 0 : i32
    return %c0_i32, %c0_i32_0 : i32, i32
  }
  func.func @transform_10(%arg0: i32) -> (i32, i32) {
    %c0_i32 = arith.constant 0 : i32
    %c0_i32_0 = arith.constant 0 : i32
    %c0_i32_1 = arith.constant 0 : i32
    return %c0_i32, %c0_i32_0 : i32, i32
  }
  func.func @transform_11(%arg0: i32) -> (i32, i32) {
    %c0_i32 = arith.constant 0 : i32
    %c0_i32_0 = arith.constant 0 : i32
    %c0_i32_1 = arith.constant 0 : i32
    return %c0_i32, %c0_i32_0 : i32, i32
  }
  func.func @transform_12(%arg0: i32) -> (i32, i32) {
    %c0_i32 = arith.constant 0 : i32
    %c0_i32_0 = arith.constant 0 : i32
    %c0_i32_1 = arith.constant 0 : i32
    return %c0_i32, %c0_i32_0 : i32, i32
  }
  func.func @transform_13(%arg0: i32) -> (i32, i32) {
    %c0_i32 = arith.constant 0 : i32
    %c0_i32_0 = arith.constant 0 : i32
    return %arg0, %c0_i32 : i32, i32
  }
  func.func @transform_14(%arg0: i32) -> (i32, i32) {
    %c0_i32 = arith.constant 0 : i32
    %c0_i32_0 = arith.constant 0 : i32
    return %arg0, %c0_i32 : i32, i32
  }
}

</mosaic_0001>

<llo_original>
// kernel: tpu_custom_call.1
$region0: #{tpu_custom_call.1}
  #allocation0 [shape = 'u32[]', space=smem, size = 0x4, offset = 0x4, fixed_abs, tag = 'smem constant byte address 0x4 - core index']
  #allocation1 [shape = 'u32[144,128]{1,0:T(1,128)}', space=vmem, size = 0x12000, scoped, tag = 'internal scratch']
  %s0 = inlined_call_operand.vmem [shape: f32[112,32], index: 0, kind: input, shape index: {}]
  %s1 = inlined_call_operand.vmem [shape: f32[32,64], index: 1, kind: input, shape index: {}]
  %s2 = inlined_call_operand.vmem [shape: f32[1,64], index: 2, kind: input, shape index: {}]
  %s3 = inlined_call_operand.vmem [shape: f32[64,32], index: 3, kind: input, shape index: {}]
  %s4 = inlined_call_operand.vmem [shape: f32[1,32], index: 4, kind: input, shape index: {}]
  %s5 = inlined_call_operand.vmem [shape: f32[32,16], index: 5, kind: input, shape index: {}]
  %s6 = inlined_call_operand.vmem [shape: f32[1,16], index: 6, kind: input, shape index: {}]
  %s7 = inlined_call_operand.vmem [shape: f32[16,32], index: 7, kind: input, shape index: {}]
  %s8 = inlined_call_operand.vmem [shape: f32[1,32], index: 8, kind: input, shape index: {}]
  %s9 = inlined_call_operand.vmem [shape: f32[32,64], index: 9, kind: input, shape index: {}]
  %s10 = inlined_call_operand.vmem [shape: f32[1,64], index: 10, kind: input, shape index: {}]
  %s11 = inlined_call_operand.vmem [shape: f32[64,32], index: 11, kind: input, shape index: {}]
  %s12 = inlined_call_operand.vmem [shape: f32[1,32], index: 12, kind: input, shape index: {}]
  %s13 = inlined_call_operand.vmem [shape: f32[112,16], index: 13, kind: output, shape index: {0}]
  %s14 = inlined_call_operand.vmem [shape: f32[112,32], index: 14, kind: output, shape index: {1}]
  %15 = xla_tuple %s13, %s14
  %s16 = sld [smem:[#allocation0]]
  $region93: #{tpu_custom_call.1} parent=0
    _
  %s18 = ssub.s32 1, %s16
  %s19 = scalar_select 0, %s18, %s16
  loop: start=0, step=1, limit=4
  $region2: #{tpu_custom_call.1} parent=0 // loop_pre_header
    _
  $region3: #{tpu_custom_call.1} parent=0 // loop_header
    %s21 = sphi 0, %s25
    %p22 = scmp.ge.s32.totalorder %s21, 4
    %s31 = sphi 0, %s33
    %s34 = sphi 0, %s31
    %s35 = sphi 0, %s34
    %s51 = sphi 0, %s35
    %s55 = sphi 0, %s55
    %s57 = sphi 0, %s55
    %s58 = sphi 0, %s57
    %s72 = sphi 0, %s58
    %s76 = sphi 0, %s76
    %s78 = sphi 0, %s76
    %s79 = sphi 0, %s78
    %s93 = sphi 0, %s79
    %s97 = sphi 0, %s97
    %s99 = sphi 0, %s97
    %s100 = sphi 0, %s99
    %s114 = sphi 0, %s100
    %s118 = sphi 0, %s118
    %s120 = sphi 0, %s118
    %s121 = sphi 0, %s120
    %s135 = sphi 0, %s121
    %s139 = sphi 0, %s139
    %s141 = sphi 0, %s139
    %s142 = sphi 0, %s141
    %s156 = sphi 0, %s142
    %s160 = sphi 0, %s160
    %s162 = sphi 0, %s160
    %s163 = sphi 0, %s162
    %s177 = sphi 0, %s163
    %s181 = sphi 0, %s181
    %s183 = sphi 0, %s181
    %s184 = sphi 0, %s183
    %s198 = sphi 0, %s184
    %s202 = sphi 0, %s202
    %s204 = sphi 0, %s202
    %s205 = sphi 0, %s204
    %s219 = sphi 0, %s205
    %s223 = sphi 0, %s223
    %s225 = sphi 0, %s223
    %s226 = sphi 0, %s225
    %s240 = sphi 0, %s226
    %s244 = sphi 0, %s244
    %s246 = sphi 0, %s244
    %s247 = sphi 0, %s246
    %s261 = sphi 0, %s247
    %s265 = sphi 0, %s265
    %s267 = sphi 0, %s265
    %s268 = sphi 0, %s267
    %s282 = sphi 0, %s268
    %s286 = sphi 0, %s286
    %s288 = sphi 0, %s286
    %s289 = sphi 0, %s288
    %s303 = sphi 0, %s289
    %s309 = sphi 0, %s311
    %s312 = sphi 0, %s309
    %s313 = sphi 0, %s312
    %s329 = sphi 0, %s313
    %s335 = sphi 0, %s337
    %s338 = sphi 0, %s335
    %s339 = sphi 0, %s338
    %s355 = sphi 0, %s339
  $region4: #{tpu_custom_call.1} parent=0 // loop_header_branch
    %24 = sbr.rel (%p22) target = $region8
  $region5: #{tpu_custom_call.1} parent=0 // loop_body
    %s26 = ssub.s32 %s21, 1
    %s27 = ssub.s32 %s21, 2
    %s28 = sadd.s32 %s21, 1
    %s29 = ssub.s32 %s21, %s28
    %p30 = scmp.eq.s32.totalorder %s29, 0
    %s32 = sadd.s32 %s31, 1
    %s33 = scalar_select %p30, %s31, %s32
    %p36 = pneg %p30
    %p37 = scmp.eq.s32.totalorder %s21, 1
    %p38 = por %p36, %p37
    %p39 = scmp.ne.s32.totalorder %s31, %s34
    %p40 = scmp.eq.s32.totalorder %s21, 0
    %p41 = por %p39, %p40
    %p42 = scmp.ne.s32.totalorder %s31, %s34
    %p43 = scmp.eq.s32.totalorder %s26, 1
    %p44 = por %p42, %p43
    %p45 = scmp.ne.s32.totalorder %s34, %s35
    %p46 = scmp.eq.s32.totalorder %s26, 0
    %p47 = por %p45, %p46
    %p48 = scmp.ne.s32.totalorder %s34, %s35
    %p49 = scmp.eq.s32.totalorder %s27, 1
    %p50 = por %p48, %p49
    %p52 = scmp.ne.s32.totalorder %s35, %s51
    %p53 = scmp.eq.s32.totalorder %s27, 0
    %p54 = por %p52, %p53
    %s56 = sadd.s32 %s55, 1
    %p59 = scmp.eq.s32.totalorder %s21, 1
    %p60 = scmp.ne.s32.totalorder %s55, %s57
    %p61 = scmp.eq.s32.totalorder %s21, 0
    %p62 = por %p60, %p61
    %p63 = scmp.ne.s32.totalorder %s55, %s57
    %p64 = scmp.eq.s32.totalorder %s26, 1
    %p65 = por %p63, %p64
    %p66 = scmp.ne.s32.totalorder %s57, %s58
    %p67 = scmp.eq.s32.totalorder %s26, 0
    %p68 = por %p66, %p67
    %p69 = scmp.ne.s32.totalorder %s57, %s58
    %p70 = scmp.eq.s32.totalorder %s27, 1
    %p71 = por %p69, %p70
    %p73 = scmp.ne.s32.totalorder %s58, %s72
    %p74 = scmp.eq.s32.totalorder %s27, 0
    %p75 = por %p73, %p74
    %s77 = sadd.s32 %s76, 1
    %p80 = scmp.eq.s32.totalorder %s21, 1
    %p81 = scmp.ne.s32.totalorder %s76, %s78
    %p82 = scmp.eq.s32.totalorder %s21, 0
    %p83 = por %p81, %p82
    %p84 = scmp.ne.s32.totalorder %s76, %s78
    %p85 = scmp.eq.s32.totalorder %s26, 1
    %p86 = por %p84, %p85
    %p87 = scmp.ne.s32.totalorder %s78, %s79
    %p88 = scmp.eq.s32.totalorder %s26, 0
    %p89 = por %p87, %p88
    %p90 = scmp.ne.s32.totalorder %s78, %s79
    %p91 = scmp.eq.s32.totalorder %s27, 1
    %p92 = por %p90, %p91
    %p94 = scmp.ne.s32.totalorder %s79, %s93
    %p95 = scmp.eq.s32.totalorder %s27, 0
    %p96 = por %p94, %p95
    %s98 = sadd.s32 %s97, 1
    %p101 = scmp.eq.s32.totalorder %s21, 1
    %p102 = scmp.ne.s32.totalorder %s97, %s99
    %p103 = scmp.eq.s32.totalorder %s21, 0
    %p104 = por %p102, %p103
    %p105 = scmp.ne.s32.totalorder %s97, %s99
    %p106 = scmp.eq.s32.totalorder %s26, 1
    %p107 = por %p105, %p106
    %p108 = scmp.ne.s32.totalorder %s99, %s100
    %p109 = scmp.eq.s32.totalorder %s26, 0
    %p110 = por %p108, %p109
    %p111 = scmp.ne.s32.totalorder %s99, %s100
    %p112 = scmp.eq.s32.totalorder %s27, 1
    %p113 = por %p111, %p112
    %p115 = scmp.ne.s32.totalorder %s100, %s114
    %p116 = scmp.eq.s32.totalorder %s27, 0
    %p117 = por %p115, %p116
    %s119 = sadd.s32 %s118, 1
    %p122 = scmp.eq.s32.totalorder %s21, 1
    %p123 = scmp.ne.s32.totalorder %s118, %s120
    %p124 = scmp.eq.s32.totalorder %s21, 0
    %p125 = por %p123, %p124
    %p126 = scmp.ne.s32.totalorder %s118, %s120
    %p127 = scmp.eq.s32.totalorder %s26, 1
    %p128 = por %p126, %p127
    %p129 = scmp.ne.s32.totalorder %s120, %s121
    %p130 = scmp.eq.s32.totalorder %s26, 0
    %p131 = por %p129, %p130
    %p132 = scmp.ne.s32.totalorder %s120, %s121
    %p133 = scmp.eq.s32.totalorder %s27, 1
    %p134 = por %p132, %p133
    %p136 = scmp.ne.s32.totalorder %s121, %s135
    %p137 = scmp.eq.s32.totalorder %s27, 0
    %p138 = por %p136, %p137
    %s140 = sadd.s32 %s139, 1
    %p143 = scmp.eq.s32.totalorder %s21, 1
    %p144 = scmp.ne.s32.totalorder %s139, %s141
    %p145 = scmp.eq.s32.totalorder %s21, 0
    %p146 = por %p144, %p145
    %p147 = scmp.ne.s32.totalorder %s139, %s141
    %p148 = scmp.eq.s32.totalorder %s26, 1
    %p149 = por %p147, %p148
    %p150 = scmp.ne.s32.totalorder %s141, %s142
    %p151 = scmp.eq.s32.totalorder %s26, 0
    %p152 = por %p150, %p151
    %p153 = scmp.ne.s32.totalorder %s141, %s142
    %p154 = scmp.eq.s32.totalorder %s27, 1
    %p155 = por %p153, %p154
    %p157 = scmp.ne.s32.totalorder %s142, %s156
    %p158 = scmp.eq.s32.totalorder %s27, 0
    %p159 = por %p157, %p158
    %s161 = sadd.s32 %s160, 1
    %p164 = scmp.eq.s32.totalorder %s21, 1
    %p165 = scmp.ne.s32.totalorder %s160, %s162
    %p166 = scmp.eq.s32.totalorder %s21, 0
    %p167 = por %p165, %p166
    %p168 = scmp.ne.s32.totalorder %s160, %s162
    %p169 = scmp.eq.s32.totalorder %s26, 1
    %p170 = por %p168, %p169
    %p171 = scmp.ne.s32.totalorder %s162, %s163
    %p172 = scmp.eq.s32.totalorder %s26, 0
    %p173 = por %p171, %p172
    %p174 = scmp.ne.s32.totalorder %s162, %s163
    %p175 = scmp.eq.s32.totalorder %s27, 1
    %p176 = por %p174, %p175
    %p178 = scmp.ne.s32.totalorder %s163, %s177
    %p179 = scmp.eq.s32.totalorder %s27, 0
    %p180 = por %p178, %p179
    %s182 = sadd.s32 %s181, 1
    %p185 = scmp.eq.s32.totalorder %s21, 1
    %p186 = scmp.ne.s32.totalorder %s181, %s183
    %p187 = scmp.eq.s32.totalorder %s21, 0
    %p188 = por %p186, %p187
    %p189 = scmp.ne.s32.totalorder %s181, %s183
    %p190 = scmp.eq.s32.totalorder %s26, 1
    %p191 = por %p189, %p190
    %p192 = scmp.ne.s32.totalorder %s183, %s184
    %p193 = scmp.eq.s32.totalorder %s26, 0
    %p194 = por %p192, %p193
    %p195 = scmp.ne.s32.totalorder %s183, %s184
    %p196 = scmp.eq.s32.totalorder %s27, 1
    %p197 = por %p195, %p196
    %p199 = scmp.ne.s32.totalorder %s184, %s198
    %p200 = scmp.eq.s32.totalorder %s27, 0
    %p201 = por %p199, %p200
    %s203 = sadd.s32 %s202, 1
    %p206 = scmp.eq.s32.totalorder %s21, 1
    %p207 = scmp.ne.s32.totalorder %s202, %s204
    %p208 = scmp.eq.s32.totalorder %s21, 0
    %p209 = por %p207, %p208
    %p210 = scmp.ne.s32.totalorder %s202, %s204
    %p211 = scmp.eq.s32.totalorder %s26, 1
    %p212 = por %p210, %p211
    %p213 = scmp.ne.s32.totalorder %s204, %s205
    %p214 = scmp.eq.s32.totalorder %s26, 0
    %p215 = por %p213, %p214
    %p216 = scmp.ne.s32.totalorder %s204, %s205
    %p217 = scmp.eq.s32.totalorder %s27, 1
    %p218 = por %p216, %p217
    %p220 = scmp.ne.s32.totalorder %s205, %s219
    %p221 = scmp.eq.s32.totalorder %s27, 0
    %p222 = por %p220, %p221
    %s224 = sadd.s32 %s223, 1
    %p227 = scmp.eq.s32.totalorder %s21, 1
    %p228 = scmp.ne.s32.totalorder %s223, %s225
    %p229 = scmp.eq.s32.totalorder %s21, 0
    %p230 = por %p228, %p229
    %p231 = scmp.ne.s32.totalorder %s223, %s225
    %p232 = scmp.eq.s32.totalorder %s26, 1
    %p233 = por %p231, %p232
    %p234 = scmp.ne.s32.totalorder %s225, %s226
    %p235 = scmp.eq.s32.totalorder %s26, 0
    %p236 = por %p234, %p235
    %p237 = scmp.ne.s32.totalorder %s225, %s226
    %p238 = scmp.eq.s32.totalorder %s27, 1
    %p239 = por %p237, %p238
    %p241 = scmp.ne.s32.totalorder %s226, %s240
    %p242 = scmp.eq.s32.totalorder %s27, 0
    %p243 = por %p241, %p242
    %s245 = sadd.s32 %s244, 1
    %p248 = scmp.eq.s32.totalorder %s21, 1
    %p249 = scmp.ne.s32.totalorder %s244, %s246
    %p250 = scmp.eq.s32.totalorder %s21, 0
    %p251 = por %p249, %p250
    %p252 = scmp.ne.s32.totalorder %s244, %s246
    %p253 = scmp.eq.s32.totalorder %s26, 1
    %p254 = por %p252, %p253
    %p255 = scmp.ne.s32.totalorder %s246, %s247
    %p256 = scmp.eq.s32.totalorder %s26, 0
    %p257 = por %p255, %p256
    %p258 = scmp.ne.s32.totalorder %s246, %s247
    %p259 = scmp.eq.s32.totalorder %s27, 1
    %p260 = por %p258, %p259
    %p262 = scmp.ne.s32.totalorder %s247, %s261
    %p263 = scmp.eq.s32.totalorder %s27, 0
    %p264 = por %p262, %p263
    %s266 = sadd.s32 %s265, 1
    %p269 = scmp.eq.s32.totalorder %s21, 1
    %p270 = scmp.ne.s32.totalorder %s265, %s267
    %p271 = scmp.eq.s32.totalorder %s21, 0
    %p272 = por %p270, %p271
    %p273 = scmp.ne.s32.totalorder %s265, %s267
    %p274 = scmp.eq.s32.totalorder %s26, 1
    %p275 = por %p273, %p274
    %p276 = scmp.ne.s32.totalorder %s267, %s268
    %p277 = scmp.eq.s32.totalorder %s26, 0
    %p278 = por %p276, %p277
    %p279 = scmp.ne.s32.totalorder %s267, %s268
    %p280 = scmp.eq.s32.totalorder %s27, 1
    %p281 = por %p279, %p280
    %p283 = scmp.ne.s32.totalorder %s268, %s282
    %p284 = scmp.eq.s32.totalorder %s27, 0
    %p285 = por %p283, %p284
    %s287 = sadd.s32 %s286, 1
    %p290 = scmp.eq.s32.totalorder %s21, 1
    %p291 = scmp.ne.s32.totalorder %s286, %s288
    %p292 = scmp.eq.s32.totalorder %s21, 0
    %p293 = por %p291, %p292
    %p294 = scmp.ne.s32.totalorder %s286, %s288
    %p295 = scmp.eq.s32.totalorder %s26, 1
    %p296 = por %p294, %p295
    %p297 = scmp.ne.s32.totalorder %s288, %s289
    %p298 = scmp.eq.s32.totalorder %s26, 0
    %p299 = por %p297, %p298
    %p300 = scmp.ne.s32.totalorder %s288, %s289
    %p301 = scmp.eq.s32.totalorder %s27, 1
    %p302 = por %p300, %p301
    %p304 = scmp.ne.s32.totalorder %s289, %s303
    %p305 = scmp.eq.s32.totalorder %s27, 0
    %p306 = por %p304, %p305
    %s307 = ssub.s32 %s21, %s28
    %p308 = scmp.eq.s32.totalorder %s307, 0
    %s310 = sadd.s32 %s309, 1
    %s311 = scalar_select %p308, %s309, %s310
    %p314 = pneg %p308
    %p315 = scmp.eq.s32.totalorder %s21, 1
    %p316 = por %p314, %p315
    %p317 = scmp.ne.s32.totalorder %s309, %s312
    %p318 = scmp.eq.s32.totalorder %s21, 0
    %p319 = por %p317, %p318
    %p320 = scmp.ne.s32.totalorder %s309, %s312
    %p321 = scmp.eq.s32.totalorder %s26, 1
    %p322 = por %p320, %p321
    %p323 = scmp.ne.s32.totalorder %s312, %s313
    %p324 = scmp.eq.s32.totalorder %s26, 0
    %p325 = por %p323, %p324
    %p326 = scmp.ne.s32.totalorder %s312, %s313
    %p327 = scmp.eq.s32.totalorder %s27, 1
    %p328 = por %p326, %p327
    %p330 = scmp.ne.s32.totalorder %s313, %s329
    %p331 = scmp.eq.s32.totalorder %s27, 0
    %p332 = por %p330, %p331
    %s333 = ssub.s32 %s21, %s28
    %p334 = scmp.eq.s32.totalorder %s333, 0
    %s336 = sadd.s32 %s335, 1
    %s337 = scalar_select %p334, %s335, %s336
    %p340 = pneg %p334
    %p341 = scmp.eq.s32.totalorder %s21, 1
    %p342 = por %p340, %p341
    %p343 = scmp.ne.s32.totalorder %s335, %s338
    %p344 = scmp.eq.s32.totalorder %s21, 0
    %p345 = por %p343, %p344
    %p346 = scmp.ne.s32.totalorder %s335, %s338
    %p347 = scmp.eq.s32.totalorder %s26, 1
    %p348 = por %p346, %p347
    %p349 = scmp.ne.s32.totalorder %s338, %s339
    %p350 = scmp.eq.s32.totalorder %s26, 0
    %p351 = por %p349, %p350
    %p352 = scmp.ne.s32.totalorder %s338, %s339
    %p353 = scmp.eq.s32.totalorder %s27, 1
    %p354 = por %p352, %p353
    %p356 = scmp.ne.s32.totalorder %s339, %s355
    %p357 = scmp.eq.s32.totalorder %s27, 0
    %p358 = por %p356, %p357
    %p359 = scmp.le.s32.totalorder 1, %s21
    %p360 = scmp.lt.s32.totalorder %s21, 3
    %p361 = pnand %p359, %p360
    %p362 = pneg %p361
    // Predicated region
    $region9: #{tpu_custom_call.1} parent=5 // pred_check
      _
    $region10: #{tpu_custom_call.1} parent=5 // pred_check_branch
      %364 = sbr.rel (%p361) target = $region12
    $region11: #{tpu_custom_call.1} parent=5 // pred_region
      %s365 = ssub.s32 %s21, 1
      // Predicated region
      $region13: #{tpu_custom_call.1} parent=11 // pred_check
        %p366 = pneg %p68
      $region14: #{tpu_custom_call.1} parent=11 // pred_check_branch
        %368 = sbr.rel (%p366) target = $region16
      $region15: #{tpu_custom_call.1} parent=11 // pred_region
        _
      $region16: #{tpu_custom_call.1} parent=11 // pred_fallthru
        _
      // Predicated region
      $region17: #{tpu_custom_call.1} parent=11 // pred_check
        %p369 = pneg %p89
      $region18: #{tpu_custom_call.1} parent=11 // pred_check_branch
        %371 = sbr.rel (%p369) target = $region20
      $region19: #{tpu_custom_call.1} parent=11 // pred_region
        _
      $region20: #{tpu_custom_call.1} parent=11 // pred_fallthru
        _
      // Predicated region
      $region21: #{tpu_custom_call.1} parent=11 // pred_check
        %p372 = pneg %p110
      $region22: #{tpu_custom_call.1} parent=11 // pred_check_branch
        %374 = sbr.rel (%p372) target = $region24
      $region23: #{tpu_custom_call.1} parent=11 // pred_region
        _
      $region24: #{tpu_custom_call.1} parent=11 // pred_fallthru
        _
      // Predicated region
      $region25: #{tpu_custom_call.1} parent=11 // pred_check
        %p375 = pneg %p131
      $region26: #{tpu_custom_call.1} parent=11 // pred_check_branch
        %377 = sbr.rel (%p375) target = $region28
      $region27: #{tpu_custom_call.1} parent=11 // pred_region
        _
      $region28: #{tpu_custom_call.1} parent=11 // pred_fallthru
        _
      // Predicated region
      $region29: #{tpu_custom_call.1} parent=11 // pred_check
        %p378 = pneg %p152
      $region30: #{tpu_custom_call.1} parent=11 // pred_check_branch
        %380 = sbr.rel (%p378) target = $region32
      $region31: #{tpu_custom_call.1} parent=11 // pred_region
        _
      $region32: #{tpu_custom_call.1} parent=11 // pred_fallthru
        _
      // Predicated region
      $region33: #{tpu_custom_call.1} parent=11 // pred_check
        %p381 = pneg %p173
      $region34: #{tpu_custom_call.1} parent=11 // pred_check_branch
        %383 = sbr.rel (%p381) target = $region36
      $region35: #{tpu_custom_call.1} parent=11 // pred_region
        _
      $region36: #{tpu_custom_call.1} parent=11 // pred_fallthru
        _
      // Predicated region
      $region37: #{tpu_custom_call.1} parent=11 // pred_check
        %p384 = pneg %p194
      $region38: #{tpu_custom_call.1} parent=11 // pred_check_branch
        %386 = sbr.rel (%p384) target = $region40
      $region39: #{tpu_custom_call.1} parent=11 // pred_region
        _
      $region40: #{tpu_custom_call.1} parent=11 // pred_fallthru
        _
      // Predicated region
      $region41: #{tpu_custom_call.1} parent=11 // pred_check
        %p387 = pneg %p215
      $region42: #{tpu_custom_call.1} parent=11 // pred_check_branch
        %389 = sbr.rel (%p387) target = $region44
      $region43: #{tpu_custom_call.1} parent=11 // pred_region
        _
      $region44: #{tpu_custom_call.1} parent=11 // pred_fallthru
        _
      // Predicated region
      $region45: #{tpu_custom_call.1} parent=11 // pred_check
        %p390 = pneg %p236
      $region46: #{tpu_custom_call.1} parent=11 // pred_check_branch
        %392 = sbr.rel (%p390) target = $region48
      $region47: #{tpu_custom_call.1} parent=11 // pred_region
        _
      $region48: #{tpu_custom_call.1} parent=11 // pred_fallthru
        _
      // Predicated region
      $region49: #{tpu_custom_call.1} parent=11 // pred_check
        %p393 = pneg %p257
      $region50: #{tpu_custom_call.1} parent=11 // pred_check_branch
        %395 = sbr.rel (%p393) target = $region52
      $region51: #{tpu_custom_call.1} parent=11 // pred_region
        _
      $region52: #{tpu_custom_call.1} parent=11 // pred_fallthru
        _
      // Predicated region
      $region53: #{tpu_custom_call.1} parent=11 // pred_check
        %p396 = pneg %p278
      $region54: #{tpu_custom_call.1} parent=11 // pred_check_branch
        %398 = sbr.rel (%p396) target = $region56
      $region55: #{tpu_custom_call.1} parent=11 // pred_region
        _
      $region56: #{tpu_custom_call.1} parent=11 // pred_fallthru
        _
      // Predicated region
      $region57: #{tpu_custom_call.1} parent=11 // pred_check
        %p399 = pneg %p299
      $region58: #{tpu_custom_call.1} parent=11 // pred_check_branch
        %401 = sbr.rel (%p399) target = $region60
      $region59: #{tpu_custom_call.1} parent=11 // pred_region
        _
      $region60: #{tpu_custom_call.1} parent=11 // pred_fallthru
        _
    $region12: #{tpu_custom_call.1} parent=5 // pred_fallthru
      _
    %p402 = scmp.lt.s32.totalorder %s21, 2
    // Predicated region
    $region61: #{tpu_custom_call.1} parent=5 // pred_check
      %p403 = pneg %p402
    $region62: #{tpu_custom_call.1} parent=5 // pred_check_branch
      %405 = sbr.rel (%p403) target = $region64
    $region63: #{tpu_custom_call.1} parent=5 // pred_region
      // Predicated region
      $region65: #{tpu_custom_call.1} parent=63 // pred_check
        %p406 = pneg %p41
      $region66: #{tpu_custom_call.1} parent=63 // pred_check_branch
        %408 = sbr.rel (%p406) target = $region68
      $region67: #{tpu_custom_call.1} parent=63 // pred_region
        %s409 = smul.u32 7, %s21
        %p410 = scmp.lt.s32.totalorder %s409, 13
        %s411 = scalar_select %p410, %s409, 13
        %s412 = smul.addr %s411, 8
        %s413 = scalar_lea.vmem %s0, %s412
        %s414 = smul.u32 7, %s21
      $region68: #{tpu_custom_call.1} parent=63 // pred_fallthru
        _
    $region64: #{tpu_custom_call.1} parent=5 // pred_fallthru
      _
    %p415 = scmp.le.s32.totalorder 1, %s21
    %p416 = scmp.lt.s32.totalorder %s21, 3
    %p417 = pnand %p415, %p416
    %p418 = pneg %p417
    // Predicated region
    $region69: #{tpu_custom_call.1} parent=5 // pred_check
      _
    $region70: #{tpu_custom_call.1} parent=5 // pred_check_branch
      %420 = sbr.rel (%p417) target = $region72
    $region71: #{tpu_custom_call.1} parent=5 // pred_region
      %s421 = ssub.s32 %s21, 1
      %s422 = smul.u32 7, %s26
      %p423 = scmp.lt.s32.totalorder %s422, 13
      %s424 = scalar_select %p423, %s422, 13
      %s425 = smul.addr %s424, 8
      %s426 = scalar_lea.vmem %s0, %s425
      %p427 = pneg %p47
      %p428 = pneg %p44
      %p429 = pneg %p68
      %p430 = pneg %p65
      %p431 = pneg %p89
      %p432 = pneg %p86
      %p433 = pneg %p110
      %p434 = pneg %p107
      %p435 = pneg %p131
      %p436 = pneg %p128
      %p437 = pneg %p152
      %p438 = pneg %p149
      %p439 = pneg %p173
      %p440 = pneg %p170
      %p441 = pneg %p194
      %p442 = pneg %p191
      %p443 = pneg %p215
      %p444 = pneg %p212
      %p445 = pneg %p236
      %p446 = pneg %p233
      %p447 = pneg %p257
      %p448 = pneg %p254
      %p449 = pneg %p278
      %p450 = pneg %p275
      %p451 = pneg %p299
      %p452 = pneg %p296
      %p453 = pneg %p325
      %p454 = pneg %p322
      %s455 = smul.u32 7, %s26
      %p456 = scmp.lt.s32.totalorder %s455, 13
      %s457 = scalar_select %p456, %s455, 13
      %s458 = smul.addr %s457, 8
      %s459 = scalar_lea.vmem %s13, %s458
      %p460 = pneg %p351
      %p461 = pneg %p348
      %s462 = smul.u32 7, %s26
      %p463 = scmp.lt.s32.totalorder %s462, 13
      %s464 = scalar_select %p463, %s462, 13
      %s465 = smul.addr %s464, 8
      %s466 = scalar_lea.vmem %s14, %s465
      %s467 = smul.u32 7, %s26
      %p468 = scmp.lt.s32.totalorder %s467, 13
      %s469 = scalar_select %p468, %s467, 13
      %s470 = smul.addr %s469, 8
      %s471 = scalar_lea.vmem %s0, %s470
      %s472 = smul.u32 7, %s26
      %s473 = smul.u32 7, %s26
      %p474 = scmp.lt.s32.totalorder %s473, 13
      %s475 = scalar_select %p474, %s473, 13
      %s476 = smul.addr %s475, 8
      %s477 = scalar_lea.vmem %s13, %s476
      %s478 = smul.u32 7, %s26
      %s479 = smul.u32 7, %s26
      %p480 = scmp.lt.s32.totalorder %s479, 13
      %s481 = scalar_select %p480, %s479, 13
      %s482 = smul.addr %s481, 8
      %s483 = scalar_lea.vmem %s14, %s482
      %s484 = smul.u32 7, %s26
      %v485 = vld [vmem:[%s2] sm:$0x1]
      %v486 = vld [vmem:[%s4] sm:$0x1]
      %v487 = vld [vmem:[%s6] sm:$0x1]
      %v488 = vld [vmem:[%s8] sm:$0x1]
      %v489 = vld [vmem:[%s10] sm:$0x1]
      %v490 = vld [vmem:[%s12] sm:$0x1]
      %v491 = vld [vmem:[%s471] sm:$0xff]
      %v492 = vld [vmem:[%s471 + $0x8] sm:$0xff]
      %v493 = vld [vmem:[%s471 + $0x10] sm:$0xff]
      %v494 = vld [vmem:[%s471 + $0x18] sm:$0xff]
      %v495 = vld [vmem:[%s471 + $0x20] sm:$0xff]
      %v496 = vld [vmem:[%s471 + $0x28] sm:$0xff]
      %v497 = vld [vmem:[%s471 + $0x30] sm:$0xff]
      %v498 = vld [vmem:[%s1] sm:$0xff]
      %v499 = vld [vmem:[%s1 + $0x8] sm:$0xff]
      %v500 = vld [vmem:[%s1 + $0x10] sm:$0xff]
      %v501 = vld [vmem:[%s1 + $0x18] sm:$0xff]
      %v503 = vlaneseq
      %v504 = vshrl.u32 %v503, 7
      %v505 = vsub.s32 0, %v504
      %v506 = vrot.slane %v485, %v505
      %vm508 = vcmask 261120
      %v510 = vsel %vm508, %v491, 0
      %v513 = vsel %vm508, %v492, 0
      %v516 = vsel %vm508, %v493, 0
      %v519 = vsel %vm508, %v494, 0
      %v522 = vsel %vm508, %v495, 0
      %v525 = vsel %vm508, %v496, 0
      %v528 = vsel %vm508, %v497, 0
      %530 = vmatprep.subr.mxu0 0.0
      %531 = vmatpush1.msra.mxu0 %v498
      %532 = vmatprep.subr.mxu0 0.0
      %533 = vmatpush1.msra.mxu0 %v499
      %534 = vmatprep.subr.mxu0 0.0
      %535 = vmatpush1.msra.mxu0 %v500
      %536 = vmatprep.subr.mxu0 0.0
      %537 = vmatpush1.msra.mxu0 %v501
      %538 = vmatprep.subr.mxu0 0.0
      %539 = vmatpush1.msra.mxu0 0.0
      %540 = vmatprep.subr.mxu0 0.0
      %541 = vmatpush1.msra.mxu0 0.0
      %542 = vmatprep.subr.mxu0 0.0
      %543 = vmatpush1.msra.mxu0 0.0
      %544 = vmatprep.subr.mxu0 0.0
      %545 = vmatpush1.msra.mxu0 0.0
      %546 = vmatprep.subr.mxu0 0.0
      %547 = vmatpush1.msra.mxu0 0.0
      %548 = vmatprep.subr.mxu0 0.0
      %549 = vmatpush1.msra.mxu0 0.0
      %550 = vmatprep.subr.mxu0 0.0
      %551 = vmatpush1.msra.mxu0 0.0
      %552 = vmatprep.subr.mxu0 0.0
      %553 = vmatpush1.msra.mxu0 0.0
      %554 = vmatprep.subr.mxu0 0.0
      %555 = vmatpush1.msra.mxu0 0.0
      %556 = vmatprep.subr.mxu0 0.0
      %557 = vmatpush1.msra.mxu0 0.0
      %558 = vmatprep.subr.mxu0 0.0
      %559 = vmatpush1.msra.mxu0 0.0
      %560 = vmatprep.subr.mxu0 0.0
      %561 = vmatpush1.msra.mxu0 0.0
      %562 = vmatprep.subr.mxu0 0.0
      %563 = vmatpush1.msra.mxu0 0.0
      %564 = vmatprep.subr.mxu0 0.0
      %565 = vmatpush1.msra.mxu0 0.0
      %566 = vmatprep.subr.mxu0 0.0
      %567 = vmatpush1.msra.mxu0 0.0
      %568 = vmatprep.subr.mxu0 0.0
      %569 = vmatpush1.msra.mxu0 0.0
      %570 = vmatprep.subr.mxu0 0.0
      %571 = vmatpush1.msra.mxu0 0.0
      %572 = vmatprep.subr.mxu0 0.0
      %573 = vmatpush1.msra.mxu0 0.0
      %574 = vmatprep.subr.mxu0 0.0
      %575 = vmatpush1.msra.mxu0 0.0
      %576 = vmatprep.subr.mxu0 0.0
      %577 = vmatpush1.msra.mxu0 0.0
      %578 = vmatprep.subr.mxu0 0.0
      %579 = vmatpush1.msra.mxu0 0.0
      %580 = vmatprep.subr.mxu0 0.0
      %581 = vmatpush1.msra.mxu0 0.0
      %582 = vmatprep.subr.mxu0 0.0
      %583 = vmatpush1.msra.mxu0 0.0
      %584 = vmatprep.subr.mxu0 0.0
      %585 = vmatpush1.msra.mxu0 0.0
      %586 = vmatprep.subr.mxu0 0.0
      %587 = vmatpush1.msra.mxu0 0.0
      %588 = vmatprep.subr.mxu0 0.0
      %589 = vmatpush1.msra.mxu0 0.0
      %590 = vmatprep.subr.mxu0 0.0
      %591 = vmatpush1.msra.mxu0 0.0
      %592 = vmatprep.subr.mxu0 0.0
      %593 = vmatpush1.msra.mxu0 0.0
      %594 = vmatprep.mubr.f32.mxu0 0.0
      %595 = vmatmul.mubr.f32.gmra.mrb[0].mxu0 %v510
      %v596 = vpop.f32.mrb[0].mxu0
      %v597 = vadd.f32 %v506, %v596
      %v598 = vpop.f32.mrb[0].mxu0
      %599 = vmatprep.mubr.f32.mxu0 0.0
      %600 = vmatmul.mubr.f32.gmra.mrb[0].mxu0 %v513
      %v601 = vpop.f32.mrb[0].mxu0
      %v602 = vadd.f32 %v506, %v601
      %v603 = vpop.f32.mrb[0].mxu0
      %604 = vmatprep.mubr.f32.mxu0 0.0
      %605 = vmatmul.mubr.f32.gmra.mrb[0].mxu0 %v516
      %v606 = vpop.f32.mrb[0].mxu0
      %v607 = vadd.f32 %v506, %v606
      %v608 = vpop.f32.mrb[0].mxu0
      %609 = vmatprep.mubr.f32.mxu0 0.0
      %610 = vmatmul.mubr.f32.gmra.mrb[0].mxu0 %v519
      %v611 = vpop.f32.mrb[0].mxu0
      %v612 = vadd.f32 %v506, %v611
      %v613 = vpop.f32.mrb[0].mxu0
      %614 = vmatprep.mubr.f32.mxu0 0.0
      %615 = vmatmul.mubr.f32.gmra.mrb[0].mxu0 %v522
      %v616 = vpop.f32.mrb[0].mxu0
      %v617 = vadd.f32 %v506, %v616
      %v618 = vpop.f32.mrb[0].mxu0
      %619 = vmatprep.mubr.f32.mxu0 0.0
      %620 = vmatmul.mubr.f32.gmra.mrb[0].mxu0 %v525
      %v621 = vpop.f32.mrb[0].mxu0
      %v622 = vadd.f32 %v506, %v621
      %v623 = vpop.f32.mrb[0].mxu0
      %624 = vmatprep.mubr.f32.mxu0 0.0
      %625 = vmatmul.mubr.f32.gmra.mrb[0].mxu0 %v528
      %v626 = vpop.f32.mrb[0].mxu0
      %v627 = vadd.f32 %v506, %v626
      %v628 = vpop.f32.mrb[0].mxu0
      %629 = vdwg.mxu0
      %v630 = vtanh.pop %v597
      %v631 = vtanh.pop %v602
      %v632 = vtanh.pop %v607
      %v633 = vtanh.pop %v612
      %v634 = vtanh.pop %v617
      %v635 = vtanh.pop %v622
      %v636 = vtanh.pop %v627
      %v637 = vld [vmem:[%s3] sm:$0xff]
      %v638 = vld [vmem:[%s3 + $0x8] sm:$0xff]
      %v639 = vld [vmem:[%s3 + $0x10] sm:$0xff]
      %v640 = vld [vmem:[%s3 + $0x18] sm:$0xff]
      %v641 = vld [vmem:[%s3 + $0x20] sm:$0xff]
      %v642 = vld [vmem:[%s3 + $0x28] sm:$0xff]
      %v643 = vld [vmem:[%s3 + $0x30] sm:$0xff]
      %v644 = vld [vmem:[%s3 + $0x38] sm:$0xff]
      %v646 = vlaneseq
      %v647 = vshrl.u32 %v646, 7
      %v648 = vsub.s32 0, %v647
      %v649 = vrot.slane %v486, %v648
      %vm651 = vcmask 523264
      %v653 = vsel %vm651, %v630, 0
      %v656 = vsel %vm651, %v631, 0
      %v659 = vsel %vm651, %v632, 0
      %v662 = vsel %vm651, %v633, 0
      %v665 = vsel %vm651, %v634, 0
      %v668 = vsel %vm651, %v635, 0
      %v671 = vsel %vm651, %v636, 0
      %673 = vmatprep.subr.mxu0 0.0
      %674 = vmatpush1.msra.mxu0 %v637
      %675 = vmatprep.subr.mxu0 0.0
      %676 = vmatpush1.msra.mxu0 %v638
      %677 = vmatprep.subr.mxu0 0.0
      %678 = vmatpush1.msra.mxu0 %v639
      %679 = vmatprep.subr.mxu0 0.0
      %680 = vmatpush1.msra.mxu0 %v640
      %681 = vmatprep.subr.mxu0 0.0
      %682 = vmatpush1.msra.mxu0 %v641
      %683 = vmatprep.subr.mxu0 0.0
      %684 = vmatpush1.msra.mxu0 %v642
      %685 = vmatprep.subr.mxu0 0.0
      %686 = vmatpush1.msra.mxu0 %v643
      %687 = vmatprep.subr.mxu0 0.0
      %688 = vmatpush1.msra.mxu0 %v644
      %689 = vmatprep.subr.mxu0 0.0
      %690 = vmatpush1.msra.mxu0 0.0
      %691 = vmatprep.subr.mxu0 0.0
      %692 = vmatpush1.msra.mxu0 0.0
      %693 = vmatprep.subr.mxu0 0.0
      %694 = vmatpush1.msra.mxu0 0.0
      %695 = vmatprep.subr.mxu0 0.0
      %696 = vmatpush1.msra.mxu0 0.0
      %697 = vmatprep.subr.mxu0 0.0
      %698 = vmatpush1.msra.mxu0 0.0
      %699 = vmatprep.subr.mxu0 0.0
      %700 = vmatpush1.msra.mxu0 0.0
      %701 = vmatprep.subr.mxu0 0.0
      %702 = vmatpush1.msra.mxu0 0.0
      %703 = vmatprep.subr.mxu0 0.0
      %704 = vmatpush1.msra.mxu0 0.0
      %705 = vmatprep.subr.mxu0 0.0
      %706 = vmatpush1.msra.mxu0 0.0
      %707 = vmatprep.subr.mxu0 0.0
      %708 = vmatpush1.msra.mxu0 0.0
      %709 = vmatprep.subr.mxu0 0.0
      %710 = vmatpush1.msra.mxu0 0.0
      %711 = vmatprep.subr.mxu0 0.0
      %712 = vmatpush1.msra.mxu0 0.0
      %713 = vmatprep.subr.mxu0 0.0
      %714 = vmatpush1.msra.mxu0 0.0
      %715 = vmatprep.subr.mxu0 0.0
      %716 = vmatpush1.msra.mxu0 0.0
      %717 = vmatprep.subr.mxu0 0.0
      %718 = vmatpush1.msra.mxu0 0.0
      %719 = vmatprep.subr.mxu0 0.0
      %720 = vmatpush1.msra.mxu0 0.0
      %721 = vmatprep.subr.mxu0 0.0
      %722 = vmatpush1.msra.mxu0 0.0
      %723 = vmatprep.subr.mxu0 0.0
      %724 = vmatpush1.msra.mxu0 0.0
      %725 = vmatprep.subr.mxu0 0.0
      %726 = vmatpush1.msra.mxu0 0.0
      %727 = vmatprep.subr.mxu0 0.0
      %728 = vmatpush1.msra.mxu0 0.0
      %729 = vmatprep.subr.mxu0 0.0
      %730 = vmatpush1.msra.mxu0 0.0
      %731 = vmatprep.subr.mxu0 0.0
      %732 = vmatpush1.msra.mxu0 0.0
      %733 = vmatprep.subr.mxu0 0.0
      %734 = vmatpush1.msra.mxu0 0.0
      %735 = vmatprep.subr.mxu0 0.0
      %736 = vmatpush1.msra.mxu0 0.0
      %737 = vmatprep.mubr.f32.mxu0 0.0
      %738 = vmatmul.mubr.f32.gmra.mrb[0].mxu0 %v653
      %v739 = vpop.f32.mrb[0].mxu0
      %v740 = vadd.f32 %v649, %v739
      %v741 = vpop.f32.mrb[0].mxu0
      %742 = vmatprep.mubr.f32.mxu0 0.0
      %743 = vmatmul.mubr.f32.gmra.mrb[0].mxu0 %v656
      %v744 = vpop.f32.mrb[0].mxu0
      %v745 = vadd.f32 %v649, %v744
      %v746 = vpop.f32.mrb[0].mxu0
      %747 = vmatprep.mubr.f32.mxu0 0.0
      %748 = vmatmul.mubr.f32.gmra.mrb[0].mxu0 %v659
      %v749 = vpop.f32.mrb[0].mxu0
      %v750 = vadd.f32 %v649, %v749
      %v751 = vpop.f32.mrb[0].mxu0
      %752 = vmatprep.mubr.f32.mxu0 0.0
      %753 = vmatmul.mubr.f32.gmra.mrb[0].mxu0 %v662
      %v754 = vpop.f32.mrb[0].mxu0
      %v755 = vadd.f32 %v649, %v754
      %v756 = vpop.f32.mrb[0].mxu0
      %757 = vmatprep.mubr.f32.mxu0 0.0
      %758 = vmatmul.mubr.f32.gmra.mrb[0].mxu0 %v665
      %v759 = vpop.f32.mrb[0].mxu0
      %v760 = vadd.f32 %v649, %v759
      %v761 = vpop.f32.mrb[0].mxu0
      %762 = vmatprep.mubr.f32.mxu0 0.0
      %763 = vmatmul.mubr.f32.gmra.mrb[0].mxu0 %v668
      %v764 = vpop.f32.mrb[0].mxu0
      %v765 = vadd.f32 %v649, %v764
      %v766 = vpop.f32.mrb[0].mxu0
      %767 = vmatprep.mubr.f32.mxu0 0.0
      %768 = vmatmul.mubr.f32.gmra.mrb[0].mxu0 %v671
      %v769 = vpop.f32.mrb[0].mxu0
      %v770 = vadd.f32 %v649, %v769
      %v771 = vpop.f32.mrb[0].mxu0
      %772 = vdwg.mxu0
      %v773 = vtanh.pop %v740
      %v774 = vtanh.pop %v745
      %v775 = vtanh.pop %v750
      %v776 = vtanh.pop %v755
      %v777 = vtanh.pop %v760
      %v778 = vtanh.pop %v765
      %v779 = vtanh.pop %v770
      %v780 = vld [vmem:[%s5] sm:$0xff]
      %v781 = vld [vmem:[%s5 + $0x8] sm:$0xff]
      %v782 = vld [vmem:[%s5 + $0x10] sm:$0xff]
      %v783 = vld [vmem:[%s5 + $0x18] sm:$0xff]
      %v785 = vlaneseq
      %v786 = vshrl.u32 %v785, 7
      %v787 = vsub.s32 0, %v786
      %v788 = vrot.slane %v487, %v787
      %v791 = vsel %vm508, %v773, 0
      %v794 = vsel %vm508, %v774, 0
      %v797 = vsel %vm508, %v775, 0
      %v800 = vsel %vm508, %v776, 0
      %v803 = vsel %vm508, %v777, 0
      %v806 = vsel %vm508, %v778, 0
      %v809 = vsel %vm508, %v779, 0
      %811 = vmatprep.subr.mxu0 0.0
      %812 = vmatpush1.msra.mxu0 %v780
      %813 = vmatprep.subr.mxu0 0.0
      %814 = vmatpush1.msra.mxu0 %v781
      %815 = vmatprep.subr.mxu0 0.0
      %816 = vmatpush1.msra.mxu0 %v782
      %817 = vmatprep.subr.mxu0 0.0
      %818 = vmatpush1.msra.mxu0 %v783
      %819 = vmatprep.subr.mxu0 0.0
      %820 = vmatpush1.msra.mxu0 0.0
      %821 = vmatprep.subr.mxu0 0.0
      %822 = vmatpush1.msra.mxu0 0.0
      %823 = vmatprep.subr.mxu0 0.0
      %824 = vmatpush1.msra.mxu0 0.0
      %825 = vmatprep.subr.mxu0 0.0
      %826 = vmatpush1.msra.mxu0 0.0
      %827 = vmatprep.subr.mxu0 0.0
      %828 = vmatpush1.msra.mxu0 0.0
      %829 = vmatprep.subr.mxu0 0.0
      %830 = vmatpush1.msra.mxu0 0.0
      %831 = vmatprep.subr.mxu0 0.0
      %832 = vmatpush1.msra.mxu0 0.0
      %833 = vmatprep.subr.mxu0 0.0
      %834 = vmatpush1.msra.mxu0 0.0
      %835 = vmatprep.subr.mxu0 0.0
      %836 = vmatpush1.msra.mxu0 0.0
      %837 = vmatprep.subr.mxu0 0.0
      %838 = vmatpush1.msra.mxu0 0.0
      %839 = vmatprep.subr.mxu0 0.0
      %840 = vmatpush1.msra.mxu0 0.0
      %841 = vmatprep.subr.mxu0 0.0
      %842 = vmatpush1.msra.mxu0 0.0
      %843 = vmatprep.subr.mxu0 0.0
      %844 = vmatpush1.msra.mxu0 0.0
      %845 = vmatprep.subr.mxu0 0.0
      %846 = vmatpush1.msra.mxu0 0.0
      %847 = vmatprep.subr.mxu0 0.0
      %848 = vmatpush1.msra.mxu0 0.0
      %849 = vmatprep.subr.mxu0 0.0
      %850 = vmatpush1.msra.mxu0 0.0
      %851 = vmatprep.subr.mxu0 0.0
      %852 = vmatpush1.msra.mxu0 0.0
      %853 = vmatprep.subr.mxu0 0.0
      %854 = vmatpush1.msra.mxu0 0.0
      %855 = vmatprep.subr.mxu0 0.0
      %856 = vmatpush1.msra.mxu0 0.0
      %857 = vmatprep.subr.mxu0 0.0
      %858 = vmatpush1.msra.mxu0 0.0
      %859 = vmatprep.subr.mxu0 0.0
      %860 = vmatpush1.msra.mxu0 0.0
      %861 = vmatprep.subr.mxu0 0.0
      %862 = vmatpush1.msra.mxu0 0.0
      %863 = vmatprep.subr.mxu0 0.0
      %864 = vmatpush1.msra.mxu0 0.0
      %865 = vmatprep.subr.mxu0 0.0
      %866 = vmatpush1.msra.mxu0 0.0
      %867 = vmatprep.subr.mxu0 0.0
      %868 = vmatpush1.msra.mxu0 0.0
      %869 = vmatprep.subr.mxu0 0.0
      %870 = vmatpush1.msra.mxu0 0.0
      %871 = vmatprep.subr.mxu0 0.0
      %872 = vmatpush1.msra.mxu0 0.0
      %873 = vmatprep.subr.mxu0 0.0
      %874 = vmatpush1.msra.mxu0 0.0
      %875 = vmatprep.mubr.f32.mxu0 0.0
      %876 = vmatmul.mubr.f32.gmra.mrb[0].mxu0 %v791
      %v877 = vpop.f32.mrb[0].mxu0
      %v878 = vadd.f32 %v788, %v877
      %v879 = vpop.f32.mrb[0].mxu0
      %880 = vmatprep.mubr.f32.mxu0 0.0
      %881 = vmatmul.mubr.f32.gmra.mrb[0].mxu0 %v794
      %v882 = vpop.f32.mrb[0].mxu0
      %v883 = vadd.f32 %v788, %v882
      %v884 = vpop.f32.mrb[0].mxu0
      %885 = vmatprep.mubr.f32.mxu0 0.0
      %886 = vmatmul.mubr.f32.gmra.mrb[0].mxu0 %v797
      %v887 = vpop.f32.mrb[0].mxu0
      %v888 = vadd.f32 %v788, %v887
      %v889 = vpop.f32.mrb[0].mxu0
      %890 = vmatprep.mubr.f32.mxu0 0.0
      %891 = vmatmul.mubr.f32.gmra.mrb[0].mxu0 %v800
      %v892 = vpop.f32.mrb[0].mxu0
      %v893 = vadd.f32 %v788, %v892
      %v894 = vpop.f32.mrb[0].mxu0
      %895 = vmatprep.mubr.f32.mxu0 0.0
      %896 = vmatmul.mubr.f32.gmra.mrb[0].mxu0 %v803
      %v897 = vpop.f32.mrb[0].mxu0
      %v898 = vadd.f32 %v788, %v897
      %v899 = vpop.f32.mrb[0].mxu0
      %900 = vmatprep.mubr.f32.mxu0 0.0
      %901 = vmatmul.mubr.f32.gmra.mrb[0].mxu0 %v806
      %v902 = vpop.f32.mrb[0].mxu0
      %v903 = vadd.f32 %v788, %v902
      %v904 = vpop.f32.mrb[0].mxu0
      %905 = vmatprep.mubr.f32.mxu0 0.0
      %906 = vmatmul.mubr.f32.gmra.mrb[0].mxu0 %v809
      %v907 = vpop.f32.mrb[0].mxu0
      %v908 = vadd.f32 %v788, %v907
      %v909 = vpop.f32.mrb[0].mxu0
      %910 = vdwg.mxu0
      %vm911 = vcmask 130048
      %912 = vst.msk [vmem:[%s477] sm:$0xff] %vm911, %v878
      %913 = vst.msk [vmem:[%s477 + $0x8] sm:$0xff] %vm911, %v883
      %914 = vst.msk [vmem:[%s477 + $0x10] sm:$0xff] %vm911, %v888
      %915 = vst.msk [vmem:[%s477 + $0x18] sm:$0xff] %vm911, %v893
      %916 = vst.msk [vmem:[%s477 + $0x20] sm:$0xff] %vm911, %v898
      %917 = vst.msk [vmem:[%s477 + $0x28] sm:$0xff] %vm911, %v903
      %918 = vst.msk [vmem:[%s477 + $0x30] sm:$0xff] %vm911, %v908
      %v919 = vld [vmem:[%s7] sm:$0xff]
      %v920 = vld [vmem:[%s7 + $0x8] sm:$0xff]
      %v922 = vlaneseq
      %v923 = vshrl.u32 %v922, 7
      %v924 = vsub.s32 0, %v923
      %v925 = vrot.slane %v488, %v924
      %v928 = vsel %vm911, %v878, 0
      %v931 = vsel %vm911, %v883, 0
      %v934 = vsel %vm911, %v888, 0
      %v937 = vsel %vm911, %v893, 0
      %v940 = vsel %vm911, %v898, 0
      %v943 = vsel %vm911, %v903, 0
      %v946 = vsel %vm911, %v908, 0
      %948 = vmatprep.subr.mxu0 0.0
      %949 = vmatpush1.msra.mxu0 %v919
      %950 = vmatprep.subr.mxu0 0.0
      %951 = vmatpush1.msra.mxu0 %v920
      %952 = vmatprep.subr.mxu0 0.0
      %953 = vmatpush1.msra.mxu0 0.0
      %954 = vmatprep.subr.mxu0 0.0
      %955 = vmatpush1.msra.mxu0 0.0
      %956 = vmatprep.subr.mxu0 0.0
      %957 = vmatpush1.msra.mxu0 0.0
      %958 = vmatprep.subr.mxu0 0.0
      %959 = vmatpush1.msra.mxu0 0.0
      %960 = vmatprep.subr.mxu0 0.0
      %961 = vmatpush1.msra.mxu0 0.0
      %962 = vmatprep.subr.mxu0 0.0
      %963 = vmatpush1.msra.mxu0 0.0
      %964 = vmatprep.subr.mxu0 0.0
      %965 = vmatpush1.msra.mxu0 0.0
      %966 = vmatprep.subr.mxu0 0.0
      %967 = vmatpush1.msra.mxu0 0.0
      %968 = vmatprep.subr.mxu0 0.0
      %969 = vmatpush1.msra.mxu0 0.0
      %970 = vmatprep.subr.mxu0 0.0
      %971 = vmatpush1.msra.mxu0 0.0
      %972 = vmatprep.subr.mxu0 0.0
      %973 = vmatpush1.msra.mxu0 0.0
      %974 = vmatprep.subr.mxu0 0.0
      %975 = vmatpush1.msra.mxu0 0.0
      %976 = vmatprep.subr.mxu0 0.0
      %977 = vmatpush1.msra.mxu0 0.0
      %978 = vmatprep.subr.mxu0 0.0
      %979 = vmatpush1.msra.mxu0 0.0
      %980 = vmatprep.subr.mxu0 0.0
      %981 = vmatpush1.msra.mxu0 0.0
      %982 = vmatprep.subr.mxu0 0.0
      %983 = vmatpush1.msra.mxu0 0.0
      %984 = vmatprep.subr.mxu0 0.0
      %985 = vmatpush1.msra.mxu0 0.0
      %986 = vmatprep.subr.mxu0 0.0
      %987 = vmatpush1.msra.mxu0 0.0
      %988 = vmatprep.subr.mxu0 0.0
      %989 = vmatpush1.msra.mxu0 0.0
      %990 = vmatprep.subr.mxu0 0.0
      %991 = vmatpush1.msra.mxu0 0.0
      %992 = vmatprep.subr.mxu0 0.0
      %993 = vmatpush1.msra.mxu0 0.0
      %994 = vmatprep.subr.mxu0 0.0
      %995 = vmatpush1.msra.mxu0 0.0
      %996 = vmatprep.subr.mxu0 0.0
      %997 = vmatpush1.msra.mxu0 0.0
      %998 = vmatprep.subr.mxu0 0.0
      %999 = vmatpush1.msra.mxu0 0.0
      %1000 = vmatprep.subr.mxu0 0.0
      %1001 = vmatpush1.msra.mxu0 0.0
      %1002 = vmatprep.subr.mxu0 0.0
      %1003 = vmatpush1.msra.mxu0 0.0
      %1004 = vmatprep.subr.mxu0 0.0
      %1005 = vmatpush1.msra.mxu0 0.0
      %1006 = vmatprep.subr.mxu0 0.0
      %1007 = vmatpush1.msra.mxu0 0.0
      %1008 = vmatprep.subr.mxu0 0.0
      %1009 = vmatpush1.msra.mxu0 0.0
      %1010 = vmatprep.subr.mxu0 0.0
      %1011 = vmatpush1.msra.mxu0 0.0
      %1012 = vmatprep.mubr.f32.mxu0 0.0
      %1013 = vmatmul.mubr.f32.gmra.mrb[0].mxu0 %v928
      %v1014 = vpop.f32.mrb[0].mxu0
      %v1015 = vadd.f32 %v925, %v1014
      %v1016 = vpop.f32.mrb[0].mxu0
      %1017 = vmatprep.mubr.f32.mxu0 0.0
      %1018 = vmatmul.mubr.f32.gmra.mrb[0].mxu0 %v931
      %v1019 = vpop.f32.mrb[0].mxu0
      %v1020 = vadd.f32 %v925, %v1019
      %v1021 = vpop.f32.mrb[0].mxu0
      %1022 = vmatprep.mubr.f32.mxu0 0.0
      %1023 = vmatmul.mubr.f32.gmra.mrb[0].mxu0 %v934
      %v1024 = vpop.f32.mrb[0].mxu0
      %v1025 = vadd.f32 %v925, %v1024
      %v1026 = vpop.f32.mrb[0].mxu0
      %1027 = vmatprep.mubr.f32.mxu0 0.0
      %1028 = vmatmul.mubr.f32.gmra.mrb[0].mxu0 %v937
      %v1029 = vpop.f32.mrb[0].mxu0
      %v1030 = vadd.f32 %v925, %v1029
      %v1031 = vpop.f32.mrb[0].mxu0
      %1032 = vmatprep.mubr.f32.mxu0 0.0
      %1033 = vmatmul.mubr.f32.gmra.mrb[0].mxu0 %v940
      %v1034 = vpop.f32.mrb[0].mxu0
      %v1035 = vadd.f32 %v925, %v1034
      %v1036 = vpop.f32.mrb[0].mxu0
      %1037 = vmatprep.mubr.f32.mxu0 0.0
      %1038 = vmatmul.mubr.f32.gmra.mrb[0].mxu0 %v943
      %v1039 = vpop.f32.mrb[0].mxu0
      %v1040 = vadd.f32 %v925, %v1039
      %v1041 = vpop.f32.mrb[0].mxu0
      %1042 = vmatprep.mubr.f32.mxu0 0.0
      %1043 = vmatmul.mubr.f32.gmra.mrb[0].mxu0 %v946
      %v1044 = vpop.f32.mrb[0].mxu0
      %v1045 = vadd.f32 %v925, %v1044
      %v1046 = vpop.f32.mrb[0].mxu0
      %1047 = vdwg.mxu0
      %v1048 = vtanh.pop %v1015
      %v1049 = vtanh.pop %v1020
      %v1050 = vtanh.pop %v1025
      %v1051 = vtanh.pop %v1030
      %v1052 = vtanh.pop %v1035
      %v1053 = vtanh.pop %v1040
      %v1054 = vtanh.pop %v1045
      %v1055 = vld [vmem:[%s9] sm:$0xff]
      %v1056 = vld [vmem:[%s9 + $0x8] sm:$0xff]
      %v1057 = vld [vmem:[%s9 + $0x10] sm:$0xff]
      %v1058 = vld [vmem:[%s9 + $0x18] sm:$0xff]
      %v1060 = vlaneseq
      %v1061 = vshrl.u32 %v1060, 7
      %v1062 = vsub.s32 0, %v1061
      %v1063 = vrot.slane %v489, %v1062
      %v1066 = vsel %vm508, %v1048, 0
      %v1069 = vsel %vm508, %v1049, 0
      %v1072 = vsel %vm508, %v1050, 0
      %v1075 = vsel %vm508, %v1051, 0
      %v1078 = vsel %vm508, %v1052, 0
      %v1081 = vsel %vm508, %v1053, 0
      %v1084 = vsel %vm508, %v1054, 0
      %1086 = vmatprep.subr.mxu0 0.0
      %1087 = vmatpush1.msra.mxu0 %v1055
      %1088 = vmatprep.subr.mxu0 0.0
      %1089 = vmatpush1.msra.mxu0 %v1056
      %1090 = vmatprep.subr.mxu0 0.0
      %1091 = vmatpush1.msra.mxu0 %v1057
      %1092 = vmatprep.subr.mxu0 0.0
      %1093 = vmatpush1.msra.mxu0 %v1058
      %1094 = vmatprep.subr.mxu0 0.0
      %1095 = vmatpush1.msra.mxu0 0.0
      %1096 = vmatprep.subr.mxu0 0.0
      %1097 = vmatpush1.msra.mxu0 0.0
      %1098 = vmatprep.subr.mxu0 0.0
      %1099 = vmatpush1.msra.mxu0 0.0
      %1100 = vmatprep.subr.mxu0 0.0
      %1101 = vmatpush1.msra.mxu0 0.0
      %1102 = vmatprep.subr.mxu0 0.0
      %1103 = vmatpush1.msra.mxu0 0.0
      %1104 = vmatprep.subr.mxu0 0.0
      %1105 = vmatpush1.msra.mxu0 0.0
      %1106 = vmatprep.subr.mxu0 0.0
      %1107 = vmatpush1.msra.mxu0 0.0
      %1108 = vmatprep.subr.mxu0 0.0
      %1109 = vmatpush1.msra.mxu0 0.0
      %1110 = vmatprep.subr.mxu0 0.0
      %1111 = vmatpush1.msra.mxu0 0.0
      %1112 = vmatprep.subr.mxu0 0.0
      %1113 = vmatpush1.msra.mxu0 0.0
      %1114 = vmatprep.subr.mxu0 0.0
      %1115 = vmatpush1.msra.mxu0 0.0
      %1116 = vmatprep.subr.mxu0 0.0
      %1117 = vmatpush1.msra.mxu0 0.0
      %1118 = vmatprep.subr.mxu0 0.0
      %1119 = vmatpush1.msra.mxu0 0.0
      %1120 = vmatprep.subr.mxu0 0.0
      %1121 = vmatpush1.msra.mxu0 0.0
      %1122 = vmatprep.subr.mxu0 0.0
      %1123 = vmatpush1.msra.mxu0 0.0
      %1124 = vmatprep.subr.mxu0 0.0
      %1125 = vmatpush1.msra.mxu0 0.0
      %1126 = vmatprep.subr.mxu0 0.0
      %1127 = vmatpush1.msra.mxu0 0.0
      %1128 = vmatprep.subr.mxu0 0.0
      %1129 = vmatpush1.msra.mxu0 0.0
      %1130 = vmatprep.subr.mxu0 0.0
      %1131 = vmatpush1.msra.mxu0 0.0
      %1132 = vmatprep.subr.mxu0 0.0
      %1133 = vmatpush1.msra.mxu0 0.0
      %1134 = vmatprep.subr.mxu0 0.0
      %1135 = vmatpush1.msra.mxu0 0.0
      %1136 = vmatprep.subr.mxu0 0.0
      %1137 = vmatpush1.msra.mxu0 0.0
      %1138 = vmatprep.subr.mxu0 0.0
      %1139 = vmatpush1.msra.mxu0 0.0
      %1140 = vmatprep.subr.mxu0 0.0
      %1141 = vmatpush1.msra.mxu0 0.0
      %1142 = vmatprep.subr.mxu0 0.0
      %1143 = vmatpush1.msra.mxu0 0.0
      %1144 = vmatprep.subr.mxu0 0.0
      %1145 = vmatpush1.msra.mxu0 0.0
      %1146 = vmatprep.subr.mxu0 0.0
      %1147 = vmatpush1.msra.mxu0 0.0
      %1148 = vmatprep.subr.mxu0 0.0
      %1149 = vmatpush1.msra.mxu0 0.0
      %1150 = vmatprep.mubr.f32.mxu0 0.0
      %1151 = vmatmul.mubr.f32.gmra.mrb[0].mxu0 %v1066
      %v1152 = vpop.f32.mrb[0].mxu0
      %v1153 = vadd.f32 %v1063, %v1152
      %v1154 = vpop.f32.mrb[0].mxu0
      %1155 = vmatprep.mubr.f32.mxu0 0.0
      %1156 = vmatmul.mubr.f32.gmra.mrb[0].mxu0 %v1069
      %v1157 = vpop.f32.mrb[0].mxu0
      %v1158 = vadd.f32 %v1063, %v1157
      %v1159 = vpop.f32.mrb[0].mxu0
      %1160 = vmatprep.mubr.f32.mxu0 0.0
      %1161 = vmatmul.mubr.f32.gmra.mrb[0].mxu0 %v1072
      %v1162 = vpop.f32.mrb[0].mxu0
      %v1163 = vadd.f32 %v1063, %v1162
      %v1164 = vpop.f32.mrb[0].mxu0
      %1165 = vmatprep.mubr.f32.mxu0 0.0
      %1166 = vmatmul.mubr.f32.gmra.mrb[0].mxu0 %v1075
      %v1167 = vpop.f32.mrb[0].mxu0
      %v1168 = vadd.f32 %v1063, %v1167
      %v1169 = vpop.f32.mrb[0].mxu0
      %1170 = vmatprep.mubr.f32.mxu0 0.0
      %1171 = vmatmul.mubr.f32.gmra.mrb[0].mxu0 %v1078
      %v1172 = vpop.f32.mrb[0].mxu0
      %v1173 = vadd.f32 %v1063, %v1172
      %v1174 = vpop.f32.mrb[0].mxu0
      %1175 = vmatprep.mubr.f32.mxu0 0.0
      %1176 = vmatmul.mubr.f32.gmra.mrb[0].mxu0 %v1081
      %v1177 = vpop.f32.mrb[0].mxu0
      %v1178 = vadd.f32 %v1063, %v1177
      %v1179 = vpop.f32.mrb[0].mxu0
      %1180 = vmatprep.mubr.f32.mxu0 0.0
      %1181 = vmatmul.mubr.f32.gmra.mrb[0].mxu0 %v1084
      %v1182 = vpop.f32.mrb[0].mxu0
      %v1183 = vadd.f32 %v1063, %v1182
      %v1184 = vpop.f32.mrb[0].mxu0
      %1185 = vdwg.mxu0
      %v1186 = vtanh.pop %v1153
      %v1187 = vtanh.pop %v1158
      %v1188 = vtanh.pop %v1163
      %v1189 = vtanh.pop %v1168
      %v1190 = vtanh.pop %v1173
      %v1191 = vtanh.pop %v1178
      %v1192 = vtanh.pop %v1183
      %v1193 = vld [vmem:[%s11] sm:$0xff]
      %v1194 = vld [vmem:[%s11 + $0x8] sm:$0xff]
      %v1195 = vld [vmem:[%s11 + $0x10] sm:$0xff]
      %v1196 = vld [vmem:[%s11 + $0x18] sm:$0xff]
      %v1197 = vld [vmem:[%s11 + $0x20] sm:$0xff]
      %v1198 = vld [vmem:[%s11 + $0x28] sm:$0xff]
      %v1199 = vld [vmem:[%s11 + $0x30] sm:$0xff]
      %v1200 = vld [vmem:[%s11 + $0x38] sm:$0xff]
      %v1202 = vlaneseq
      %v1203 = vshrl.u32 %v1202, 7
      %v1204 = vsub.s32 0, %v1203
      %v1205 = vrot.slane %v490, %v1204
      %v1208 = vsel %vm651, %v1186, 0
      %v1211 = vsel %vm651, %v1187, 0
      %v1214 = vsel %vm651, %v1188, 0
      %v1217 = vsel %vm651, %v1189, 0
      %v1220 = vsel %vm651, %v1190, 0
      %v1223 = vsel %vm651, %v1191, 0
      %v1226 = vsel %vm651, %v1192, 0
      %1228 = vmatprep.subr.mxu0 0.0
      %1229 = vmatpush1.msra.mxu0 %v1193
      %1230 = vmatprep.subr.mxu0 0.0
      %1231 = vmatpush1.msra.mxu0 %v1194
      %1232 = vmatprep.subr.mxu0 0.0
      %1233 = vmatpush1.msra.mxu0 %v1195
      %1234 = vmatprep.subr.mxu0 0.0
      %1235 = vmatpush1.msra.mxu0 %v1196
      %1236 = vmatprep.subr.mxu0 0.0
      %1237 = vmatpush1.msra.mxu0 %v1197
      %1238 = vmatprep.subr.mxu0 0.0
      %1239 = vmatpush1.msra.mxu0 %v1198
      %1240 = vmatprep.subr.mxu0 0.0
      %1241 = vmatpush1.msra.mxu0 %v1199
      %1242 = vmatprep.subr.mxu0 0.0
      %1243 = vmatpush1.msra.mxu0 %v1200
      %1244 = vmatprep.subr.mxu0 0.0
      %1245 = vmatpush1.msra.mxu0 0.0
      %1246 = vmatprep.subr.mxu0 0.0
      %1247 = vmatpush1.msra.mxu0 0.0
      %1248 = vmatprep.subr.mxu0 0.0
      %1249 = vmatpush1.msra.mxu0 0.0
      %1250 = vmatprep.subr.mxu0 0.0
      %1251 = vmatpush1.msra.mxu0 0.0
      %1252 = vmatprep.subr.mxu0 0.0
      %1253 = vmatpush1.msra.mxu0 0.0
      %1254 = vmatprep.subr.mxu0 0.0
      %1255 = vmatpush1.msra.mxu0 0.0
      %1256 = vmatprep.subr.mxu0 0.0
      %1257 = vmatpush1.msra.mxu0 0.0
      %1258 = vmatprep.subr.mxu0 0.0
      %1259 = vmatpush1.msra.mxu0 0.0
      %1260 = vmatprep.subr.mxu0 0.0
      %1261 = vmatpush1.msra.mxu0 0.0
      %1262 = vmatprep.subr.mxu0 0.0
      %1263 = vmatpush1.msra.mxu0 0.0
      %1264 = vmatprep.subr.mxu0 0.0
      %1265 = vmatpush1.msra.mxu0 0.0
      %1266 = vmatprep.subr.mxu0 0.0
      %1267 = vmatpush1.msra.mxu0 0.0
      %1268 = vmatprep.subr.mxu0 0.0
      %1269 = vmatpush1.msra.mxu0 0.0
      %1270 = vmatprep.subr.mxu0 0.0
      %1271 = vmatpush1.msra.mxu0 0.0
      %1272 = vmatprep.subr.mxu0 0.0
      %1273 = vmatpush1.msra.mxu0 0.0
      %1274 = vmatprep.subr.mxu0 0.0
      %1275 = vmatpush1.msra.mxu0 0.0
      %1276 = vmatprep.subr.mxu0 0.0
      %1277 = vmatpush1.msra.mxu0 0.0
      %1278 = vmatprep.subr.mxu0 0.0
      %1279 = vmatpush1.msra.mxu0 0.0
      %1280 = vmatprep.subr.mxu0 0.0
      %1281 = vmatpush1.msra.mxu0 0.0
      %1282 = vmatprep.subr.mxu0 0.0
      %1283 = vmatpush1.msra.mxu0 0.0
      %1284 = vmatprep.subr.mxu0 0.0
      %1285 = vmatpush1.msra.mxu0 0.0
      %1286 = vmatprep.subr.mxu0 0.0
      %1287 = vmatpush1.msra.mxu0 0.0
      %1288 = vmatprep.subr.mxu0 0.0
      %1289 = vmatpush1.msra.mxu0 0.0
      %1290 = vmatprep.subr.mxu0 0.0
      %1291 = vmatpush1.msra.mxu0 0.0
      %1292 = vmatprep.mubr.f32.mxu0 0.0
      %1293 = vmatmul.mubr.f32.gmra.mrb[0].mxu0 %v1208
      %v1294 = vpop.f32.mrb[0].mxu0
      %v1295 = vadd.f32 %v1205, %v1294
      %v1296 = vpop.f32.mrb[0].mxu0
      %1297 = vmatprep.mubr.f32.mxu0 0.0
      %1298 = vmatmul.mubr.f32.gmra.mrb[0].mxu0 %v1211
      %v1299 = vpop.f32.mrb[0].mxu0
      %v1300 = vadd.f32 %v1205, %v1299
      %v1301 = vpop.f32.mrb[0].mxu0
      %1302 = vmatprep.mubr.f32.mxu0 0.0
      %1303 = vmatmul.mubr.f32.gmra.mrb[0].mxu0 %v1214
      %v1304 = vpop.f32.mrb[0].mxu0
      %v1305 = vadd.f32 %v1205, %v1304
      %v1306 = vpop.f32.mrb[0].mxu0
      %1307 = vmatprep.mubr.f32.mxu0 0.0
      %1308 = vmatmul.mubr.f32.gmra.mrb[0].mxu0 %v1217
      %v1309 = vpop.f32.mrb[0].mxu0
      %v1310 = vadd.f32 %v1205, %v1309
      %v1311 = vpop.f32.mrb[0].mxu0
      %1312 = vmatprep.mubr.f32.mxu0 0.0
      %1313 = vmatmul.mubr.f32.gmra.mrb[0].mxu0 %v1220
      %v1314 = vpop.f32.mrb[0].mxu0
      %v1315 = vadd.f32 %v1205, %v1314
      %v1316 = vpop.f32.mrb[0].mxu0
      %1317 = vmatprep.mubr.f32.mxu0 0.0
      %1318 = vmatmul.mubr.f32.gmra.mrb[0].mxu0 %v1223
      %v1319 = vpop.f32.mrb[0].mxu0
      %v1320 = vadd.f32 %v1205, %v1319
      %v1321 = vpop.f32.mrb[0].mxu0
      %1322 = vmatprep.mubr.f32.mxu0 0.0
      %1323 = vmatmul.mubr.f32.gmra.mrb[0].mxu0 %v1226
      %v1324 = vpop.f32.mrb[0].mxu0
      %v1325 = vadd.f32 %v1205, %v1324
      %v1326 = vpop.f32.mrb[0].mxu0
      %1327 = vdwg.mxu0
      %1328 = vst.msk [vmem:[%s483] sm:$0xff] %vm508, %v1295
      %1329 = vst.msk [vmem:[%s483 + $0x8] sm:$0xff] %vm508, %v1300
      %1330 = vst.msk [vmem:[%s483 + $0x10] sm:$0xff] %vm508, %v1305
      %1331 = vst.msk [vmem:[%s483 + $0x18] sm:$0xff] %vm508, %v1310
      %1332 = vst.msk [vmem:[%s483 + $0x20] sm:$0xff] %vm508, %v1315
      %1333 = vst.msk [vmem:[%s483 + $0x28] sm:$0xff] %vm508, %v1320
      %1334 = vst.msk [vmem:[%s483 + $0x30] sm:$0xff] %vm508, %v1325
      %s1335 = smul.u32 7, %s26
      %p1336 = scmp.lt.s32.totalorder %s1335, 13
      %s1337 = scalar_select %p1336, %s1335, 13
      %s1338 = smul.addr %s1337, 8
      %s1339 = scalar_lea.vmem %s13, %s1338
      %s1340 = smul.u32 7, %s26
      %p1341 = scmp.lt.s32.totalorder %s1340, 13
      %s1342 = scalar_select %p1341, %s1340, 13
      %s1343 = smul.addr %s1342, 8
      %s1344 = scalar_lea.vmem %s14, %s1343
      // Predicated region
      $region73: #{tpu_custom_call.1} parent=71 // pred_check
        %p1345 = pneg %p322
      $region74: #{tpu_custom_call.1} parent=71 // pred_check_branch
        %1347 = sbr.rel (%p1345) target = $region76
      $region75: #{tpu_custom_call.1} parent=71 // pred_region
        %s1348 = smul.u32 7, %s26
      $region76: #{tpu_custom_call.1} parent=71 // pred_fallthru
        _
      // Predicated region
      $region77: #{tpu_custom_call.1} parent=71 // pred_check
        %p1349 = pneg %p348
      $region78: #{tpu_custom_call.1} parent=71 // pred_check_branch
        %1351 = sbr.rel (%p1349) target = $region80
      $region79: #{tpu_custom_call.1} parent=71 // pred_region
        %s1352 = smul.u32 7, %s26
      $region80: #{tpu_custom_call.1} parent=71 // pred_fallthru
        _
    $region72: #{tpu_custom_call.1} parent=5 // pred_fallthru
      _
    %p1353 = scmp.le.s32.totalorder 2, %s21
    // Predicated region
    $region81: #{tpu_custom_call.1} parent=5 // pred_check
      %p1354 = pneg %p1353
    $region82: #{tpu_custom_call.1} parent=5 // pred_check_branch
      %1356 = sbr.rel (%p1354) target = $region84
    $region83: #{tpu_custom_call.1} parent=5 // pred_region
      %s1357 = ssub.s32 %s21, 2
      // Predicated region
      $region85: #{tpu_custom_call.1} parent=83 // pred_check
        %p1358 = pneg %p328
      $region86: #{tpu_custom_call.1} parent=83 // pred_check_branch
        %1360 = sbr.rel (%p1358) target = $region88
      $region87: #{tpu_custom_call.1} parent=83 // pred_region
        %s1361 = smul.u32 7, %s27
        %p1362 = scmp.lt.s32.totalorder %s1361, 13
        %s1363 = scalar_select %p1362, %s1361, 13
        %s1364 = smul.addr %s1363, 8
        %s1365 = scalar_lea.vmem %s13, %s1364
      $region88: #{tpu_custom_call.1} parent=83 // pred_fallthru
        _
      // Predicated region
      $region89: #{tpu_custom_call.1} parent=83 // pred_check
        %p1366 = pneg %p354
      $region90: #{tpu_custom_call.1} parent=83 // pred_check_branch
        %1368 = sbr.rel (%p1366) target = $region92
      $region91: #{tpu_custom_call.1} parent=83 // pred_region
        %s1369 = smul.u32 7, %s27
        %p1370 = scmp.lt.s32.totalorder %s1369, 13
        %s1371 = scalar_select %p1370, %s1369, 13
        %s1372 = smul.addr %s1371, 8
        %s1373 = scalar_lea.vmem %s14, %s1372
      $region92: #{tpu_custom_call.1} parent=83 // pred_fallthru
        _
    $region84: #{tpu_custom_call.1} parent=5 // pred_fallthru
      _
  $region6: #{tpu_custom_call.1} parent=0 // loop_footer
    %s25 = sadd.s32 1, %s21
  $region7: #{tpu_custom_call.1} parent=0 // loop_footer_branch
    %20 = sbr.rel target = $region3
  $region8: #{tpu_custom_call.1} parent=0 // loop_exit
    _

</llo_original>
